<compile_context>
chip_gen: v7x
topology: tpu7x:2x2x1
jax: 0.10.0
libtpu: 0.0.40
codegen_flags: <defaults>
</compile_context>

<pallas_src>
import functools

import jax
import jax.numpy as jnp
from jax.experimental import pallas as pl
from jax.experimental.pallas import tpu as pltpu

_LANE = 128


# --------------------------------------------------------------------------
# In-kernel 3x3 conv helper
# --------------------------------------------------------------------------
def _conv3x3_relu(x, wflat, bias, compute_dtype):
    """3x3 conv (valid in H, zero-padded in W) + bias + ReLU.

    x     : (Hout + 2, W, C)  -- includes one halo/padding row above & below
    wflat : (9*C, Cp)         -- (ky, kx, c)-major flattening of HWIO weights
    bias  : (1, Cp) f32
    returns (Hout, W, Cp) f32
    """
    hin, w, c = x.shape
    hout = hin - 2
    cp = wflat.shape[-1]
    xc = x.astype(compute_dtype)

    # zero-pad W in VMEM, pack the three dx taps on the lane axis.
    # TODO(synk): replace the sublane-misaligned dx slices with pltpu.roll +
    # edge masks so the shifts ride the XLU slot instead of vld/vst.
    zc = jnp.zeros((hin, 1, c), compute_dtype)
    xw = jnp.concatenate([zc, xc, zc], axis=1)                     # (hin, W+2, C)
    p3 = jnp.concatenate(
        [xw[:, 0:w], xw[:, 1:w + 1], xw[:, 2:w + 2]], axis=-1)     # (hin, W, 3C)

    # accumulate over dy: three K=3C matmuls instead of one K=9C im2col.
    acc = None
    for dy in range(3):
        band = p3[dy:dy + hout].reshape(hout * w, 3 * c)
        part = jnp.dot(band, wflat[dy * 3 * c:(dy + 1) * 3 * c],
                       preferred_element_type=jnp.float32)
        acc = part if acc is None else acc + part
    acc = acc + bias
    return jnp.maximum(acc, 0.0).reshape(hout, w, cp)


# --------------------------------------------------------------------------
# Kernel: one (batch, H-tile) block of conv1+ReLU -> conv2+ReLU -> 2x2 maxpool
# --------------------------------------------------------------------------
def _downsample_kernel(xt_ref, xm_ref, xb_ref, w1_ref, b1_ref, w2_ref, b2_ref,
                       down_ref, pool_ref):
    t = pl.program_id(1)
    nt = pl.num_programs(1)
    _, th, w, _ = xm_ref.shape
    cp = w1_ref.shape[-1]
    cdt = w1_ref.dtype                                    # MXU operand dtype

    # Assemble the H-halo'd input tile.  Halo blocks whose index_map was
    # clamped at the image border are zeroed -> conv1's zero padding.
    x_top = jnp.where(t > 0, xt_ref[0], 0.0)              # (2, W, Cin)
    x_bot = jnp.where(t < nt - 1, xb_ref[0], 0.0)         # (2, W, Cin)
    x = jnp.concatenate([x_top, xm_ref[0], x_bot], axis=0)  # (th+4, W, Cin)

    # TODO(synk): for tiny Cin, pre-pack conv1's 3 dx taps on the lane axis in
    # the wrapper (cheap, Cin small) so this patch build isn't 4/128-lane sparse.
    h1 = _conv3x3_relu(x, w1_ref[...], b1_ref[...], cdt)   # (th+2, W, Cp)

    # conv1's halo rows are real conv1 outputs only for interior tiles; at the
    # image top/bottom they must be conv2's zero padding instead.
    row = jax.lax.broadcasted_iota(jnp.int32, (th + 2, 1, 1), 0)
    keep = jnp.logical_and(jnp.logical_or(row > 0, t > 0),
                           jnp.logical_or(row < th + 1, t < nt - 1))
    h1 = jnp.where(keep, h1, 0.0)

    y = _conv3x3_relu(h1, w2_ref[...], b2_ref[...], cdt)   # (th, W, Cp)
    down_ref[...] = y.reshape(1, th, w, cp).astype(down_ref.dtype)

    # 2x2 / stride-2 max pool, all in-register:
    #   H: split leading dim + pairwise max; W: pack the (w % 2) pair into the
    #   lane dim so the max is between two 128-aligned lane slices.
    yh = y.reshape(th // 2, 2, w, cp)
    hp = jnp.maximum(yh[:, 0], yh[:, 1])                   # (th//2, W, Cp)
    pk = hp.reshape(th // 2, w // 2, 2 * cp)
    p = jnp.maximum(pk[:, :, :cp], pk[:, :, cp:])          # (th//2, W//2, Cp)
    pool_ref[...] = p.reshape(1, th // 2, w // 2, cp).astype(pool_ref.dtype)


# --------------------------------------------------------------------------
# One-time parameter layout (outside the jitted forward)
# --------------------------------------------------------------------------
def prepare_params(params, compute_dtype=jnp.bfloat16, lane=_LANE):
    """Flatten the 3x3 taps into the matmul K dim and zero-pad channels to a
    lane-dense multiple of `lane` (128; use lane=256 for deep stages on
    v6e/v7x so their 256-wide MXUs are filled; keep 128 on v5e)."""
    w1, b1 = params["w1"], params["b1"]        # (3,3,Cin,Cout), (Cout,)
    w2, b2 = params["w2"], params["b2"]        # (3,3,Cout,Cout), (Cout,)
    cin, cout = w1.shape[2], w1.shape[3]
    cp = max(lane, ((cout + lane - 1) // lane) * lane)

    w1f = jnp.pad(w1.reshape(9 * cin, cout), ((0, 0), (0, cp - cout)))
    w2f = jnp.pad(w2, ((0, 0), (0, 0), (0, cp - cout), (0, cp - cout))
                  ).reshape(9 * cp, cp)
    return dict(
        w1f=w1f.astype(compute_dtype),
        b1p=jnp.pad(b1, (0, cp - cout)).reshape(1, cp).astype(jnp.float32),
        w2f=w2f.astype(compute_dtype),
        b2p=jnp.pad(b2, (0, cp - cout)).reshape(1, cp).astype(jnp.float32),
    )


def _pick_tile_h(h, w, cin, cp, compute_itemsize, out_itemsize,
                 budget_bytes=32 * 1024 * 1024):
    """Largest even divisor of H whose per-step working set fits the budget."""
    best = 2
    for th in range(2, h + 1, 2):
        if h % th:
            continue
        est = (
            6 * (th + 4) * w * cin * 4                        # halo'd x blocks (x3, dbl-buf)
            + (th + 4) * w * 3 * cin * compute_itemsize       # conv1 dx-patch
            + (th + 2) * w * cp * (4 + 3 * compute_itemsize)  # h1 + conv2 dx-patch
            + th * w * cp * 4                                 # conv2 f32 acc
            + 2 * th * w * cp * out_itemsize                  # down block (dbl-buf)
            + 2 * (th // 2) * (w // 2) * cp * out_itemsize    # pool block (dbl-buf)
            + (9 * cin + 9 * cp + 2) * cp * compute_itemsize  # single-buffered weights
        )
        if est <= budget_bytes:
            best = th
    return best


# --------------------------------------------------------------------------
# NHWC-native forward (returns lane-padded NHWC down / pool tensors)
# --------------------------------------------------------------------------
def downsample_forward_nhwc(x_nhwc, prep, *, tile_h=None,
                            out_dtype=jnp.float32,
                            vmem_limit_bytes=48 * 1024 * 1024):
    n, h, w, cin = x_nhwc.shape
    assert h % 2 == 0 and w % 2 == 0, "2x2/stride-2 pool needs even H, W"
    cp = prep["w1f"].shape[-1]
    cdt = prep["w1f"].dtype
    if tile_h is None:
        tile_h = _pick_tile_h(h, w, cin, cp, jnp.dtype(cdt).itemsize,
                              jnp.dtype(out_dtype).itemsize)
    th = tile_h
    assert th >= 2 and th % 2 == 0 and h % th == 0, "tile_h must evenly tile H"
    nt = h // th
    hh = th // 2

    flops = 2 * n * h * w * (9 * cin * cp + 9 * cp * cp)
    bytes_accessed = (
        x_nhwc.dtype.itemsize * n * (h + 4 * nt) * w * cin
        + jnp.dtype(cdt).itemsize * (prep["w1f"].size + prep["w2f"].size)
        + 4 * (prep["b1p"].size + prep["b2p"].size)
        + jnp.dtype(out_dtype).itemsize
        * (n * h * w * cp + n * (h // 2) * (w // 2) * cp))

    in_specs = [
        # 2-row halo above / tile body / 2-row halo below.  The halo index_maps
        # clamp at the image border; clamped rows are zeroed in-kernel.
        pl.BlockSpec((1, 2, w, cin),
                     lambda b, t: (b, jnp.maximum(t * hh - 1, 0), 0, 0)),
        pl.BlockSpec((1, th, w, cin), lambda b, t: (b, t, 0, 0)),
        pl.BlockSpec((1, 2, w, cin),
                     lambda b, t: (b, jnp.minimum(t * hh + hh, h // 2 - 1), 0, 0)),
        # constant-index weights / biases: fetched once, single-buffered.
        pl.BlockSpec((9 * cin, cp), lambda b, t: (0, 0),
                     pipeline_mode=pl.Buffered(1)),
        pl.BlockSpec((1, cp), lambda b, t: (0, 0),
                     pipeline_mode=pl.Buffered(1)),
        pl.BlockSpec((9 * cp, cp), lambda b, t: (0, 0),
                     pipeline_mode=pl.Buffered(1)),
        pl.BlockSpec((1, cp), lambda b, t: (0, 0),
                     pipeline_mode=pl.Buffered(1)),
    ]
    out_specs = (
        pl.BlockSpec((1, th, w, cp), lambda b, t: (b, t, 0, 0)),
        pl.BlockSpec((1, th // 2, w // 2, cp), lambda b, t: (b, t, 0, 0)),
    )

    down_p, pool_p = pl.pallas_call(
        _downsample_kernel,
        out_shape=(jax.ShapeDtypeStruct((n, h, w, cp), out_dtype),
                   jax.ShapeDtypeStruct((n, h // 2, w // 2, cp), out_dtype)),
        grid=(n, nt),
        in_specs=in_specs,
        out_specs=out_specs,
        compiler_params=pltpu.CompilerParams(
            dimension_semantics=("parallel", "parallel"),
            vmem_limit_bytes=vmem_limit_bytes),
        cost_estimate=pl.CostEstimate(
            flops=flops, transcendentals=0, bytes_accessed=bytes_accessed),
    )(x_nhwc, x_nhwc, x_nhwc,
      prep["w1f"], prep["b1p"], prep["w2f"], prep["b2p"])
    return down_p, pool_p


# --------------------------------------------------------------------------
# NCHW in / NCHW out wrapper (parity with the PyTorch DownSample.forward)
# --------------------------------------------------------------------------
@functools.partial(jax.jit, static_argnames=("cout", "tile_h"))
def downsample_forward(x_nchw, prep, cout, tile_h=None):
    x = jnp.transpose(x_nchw, (0, 2, 3, 1))                 # NCHW -> NHWC
    # TODO(synk): in an NHWC end-to-end network call downsample_forward_nhwc
    # directly (with bf16 out_dtype) and consume the padded tensors downstream,
    # avoiding these transposes / the :cout slice that re-write `down` in HBM.
    down_p, pool_p = downsample_forward_nhwc(x, prep, tile_h=tile_h)
    down = jnp.transpose(down_p[..., :cout], (0, 3, 1, 2))
    pool = jnp.transpose(pool_p[..., :cout], (0, 3, 1, 2))
    return down, pool


def init_params(key, cin, cout):
    k1, k2, k3, k4 = jax.random.split(key, 4)
    return dict(
        w1=0.1 * jax.random.normal(k1, (3, 3, cin, cout), jnp.float32),
        b1=0.1 * jax.random.normal(k2, (cout,), jnp.float32),
        w2=0.1 * jax.random.normal(k3, (3, 3, cout, cout), jnp.float32),
        b2=0.1 * jax.random.normal(k4, (cout,), jnp.float32),
    )


# --------------------------------------------------------------------------
if __name__ == "__main__":
    key = jax.random.PRNGKey(0)
    kx, kp = jax.random.split(key)
    N, Cin, Cout, H, W = 2, 4, 8, 16, 16
    x = jax.random.normal(kx, (N, Cin, H, W), jnp.float32)
    params = init_params(kp, Cin, Cout)
    prep = prepare_params(params)          # bf16 MXU operands, f32 accumulation

    # tile_h=8 -> grid (N, 2): exercises top-border, seam, and bottom-border
    # halo handling.
    down, p = downsample_forward(x, prep, cout=Cout, tile_h=8)
    jax.block_until_ready((down, p))

    # plain-JAX f32 reference
    def reference(x_nchw, prm):
        xh = jnp.transpose(x_nchw, (0, 2, 3, 1))

        def conv(z, wgt, b):
            y = jax.lax.conv_general_dilated(
                z, wgt, window_strides=(1, 1), padding=((1, 1), (1, 1)),
                dimension_numbers=("NHWC", "HWIO", "NHWC"))
            return jnp.maximum(y + b, 0.0)

        d = conv(conv(xh, prm["w1"], prm["b1"]), prm["w2"], prm["b2"])
        n, h, w, c = d.shape
        pr = d.reshape(n, h // 2, 2, w // 2, 2, c).max(axis=(2, 4))
        return jnp.transpose(d, (0, 3, 1, 2)), jnp.transpose(pr, (0, 3, 1, 2))

    d_ref, p_ref = reference(x, params)
    assert down.shape == (N, Cout, H, W)
    assert p.shape == (N, Cout, H // 2, W // 2)
    # bf16 MXU operands -> slightly looser parity vs. the all-f32 reference.
    assert jnp.allclose(down, d_ref, atol=2e-2, rtol=2e-2)
    assert jnp.allclose(p, p_ref, atol=2e-2, rtol=2e-2)
    print("KERNEL_OK")
</pallas_src>

<mosaic_0001>
module attributes {stable_mosaic.version = 11 : i64} {
  func.func @_downsample_kernel(%arg0: i32, %arg1: i32, %arg2: memref<1x2x16x4xf32, #tpu.memory_space<vmem>>, %arg3: memref<1x8x16x4xf32, #tpu.memory_space<vmem>>, %arg4: memref<1x2x16x4xf32, #tpu.memory_space<vmem>>, %arg5: memref<36x128xbf16, #tpu.memory_space<vmem>>, %arg6: memref<1x128xf32, #tpu.memory_space<vmem>>, %arg7: memref<1152x128xbf16, #tpu.memory_space<vmem>>, %arg8: memref<1x128xf32, #tpu.memory_space<vmem>>, %arg9: memref<1x8x16x128xf32, #tpu.memory_space<vmem>>, %arg10: memref<1x4x8x128xf32, #tpu.memory_space<vmem>>) attributes {dimension_semantics = [#tpu.dimension_semantics<parallel>, #tpu.dimension_semantics<parallel>], iteration_bounds = array<i64: 2, 2>, scalar_prefetch = 0 : i64, scratch_operands = 0 : i64, tpu.core_type = #tpu.core_type<tc>, window_params = [{transform_indices = @transform_0, window_bounds = array<i64: 1, 2, 16, 4>}, {transform_indices = @transform_1, window_bounds = array<i64: 1, 8, 16, 4>}, {transform_indices = @transform_2, window_bounds = array<i64: 1, 2, 16, 4>}, {pipeline_mode = #tpu.pipeline_mode<synchronous>, transform_indices = @transform_3, window_bounds = array<i64: 36, 128>}, {pipeline_mode = #tpu.pipeline_mode<synchronous>, transform_indices = @transform_4, window_bounds = array<i64: 1, 128>}, {pipeline_mode = #tpu.pipeline_mode<synchronous>, transform_indices = @transform_5, window_bounds = array<i64: 1152, 128>}, {pipeline_mode = #tpu.pipeline_mode<synchronous>, transform_indices = @transform_6, window_bounds = array<i64: 1, 128>}, {transform_indices = @transform_7, window_bounds = array<i64: 1, 8, 16, 128>}, {transform_indices = @transform_8, window_bounds = array<i64: 1, 4, 8, 128>}]} {
    %c0_i32 = arith.constant 0 : i32
    %0 = arith.cmpi sgt, %arg1, %c0_i32 : i32
    %c0 = arith.constant 0 : index
    %c0_0 = arith.constant 0 : index
    %c0_1 = arith.constant 0 : index
    %c0_2 = arith.constant 0 : index
    %1 = vector.load %arg2[%c0, %c0_0, %c0_1, %c0_2] : memref<1x2x16x4xf32, #tpu.memory_space<vmem>>, vector<1x2x16x4xf32>
    %2 = vector.shape_cast %1 : vector<1x2x16x4xf32> to vector<2x16x4xf32>
    %cst = arith.constant 0.000000e+00 : f32
    %3 = vector.broadcast %cst : f32 to vector<2x16x4xf32>
    %4 = arith.select %0, %2, %3 : vector<2x16x4xf32>
    %c1_i32 = arith.constant 1 : i32
    %5 = arith.cmpi slt, %arg1, %c1_i32 : i32
    %c0_3 = arith.constant 0 : index
    %c0_4 = arith.constant 0 : index
    %c0_5 = arith.constant 0 : index
    %c0_6 = arith.constant 0 : index
    %6 = vector.load %arg4[%c0_3, %c0_4, %c0_5, %c0_6] : memref<1x2x16x4xf32, #tpu.memory_space<vmem>>, vector<1x2x16x4xf32>
    %7 = vector.shape_cast %6 : vector<1x2x16x4xf32> to vector<2x16x4xf32>
    %cst_7 = arith.constant 0.000000e+00 : f32
    %8 = vector.broadcast %cst_7 : f32 to vector<2x16x4xf32>
    %9 = arith.select %5, %7, %8 : vector<2x16x4xf32>
    %c0_8 = arith.constant 0 : index
    %c0_9 = arith.constant 0 : index
    %c0_10 = arith.constant 0 : index
    %c0_11 = arith.constant 0 : index
    %10 = vector.load %arg3[%c0_8, %c0_9, %c0_10, %c0_11] : memref<1x8x16x4xf32, #tpu.memory_space<vmem>>, vector<1x8x16x4xf32>
    %11 = vector.shape_cast %10 : vector<1x8x16x4xf32> to vector<8x16x4xf32>
    %12 = tpu.concatenate %4, %11, %9 in 0 : vector<2x16x4xf32>, vector<8x16x4xf32>, vector<2x16x4xf32> -> vector<12x16x4xf32>
    %c0_12 = arith.constant 0 : index
    %c0_13 = arith.constant 0 : index
    %13 = vector.load %arg5[%c0_12, %c0_13] : memref<36x128xbf16, #tpu.memory_space<vmem>>, vector<36x128xbf16>
    %c0_14 = arith.constant 0 : index
    %c0_15 = arith.constant 0 : index
    %14 = vector.load %arg6[%c0_14, %c0_15] : memref<1x128xf32, #tpu.memory_space<vmem>>, vector<1x128xf32>
    %15 = arith.truncf %12 : vector<12x16x4xf32> to vector<12x16x4xbf16>
    %cst_16 = arith.constant 0.000000e+00 : bf16
    %16 = vector.broadcast %cst_16 : bf16 to vector<12x1x4xbf16>
    %17 = tpu.concatenate %16, %15, %16 in 1 : vector<12x1x4xbf16>, vector<12x16x4xbf16>, vector<12x1x4xbf16> -> vector<12x18x4xbf16>
    %18 = vector.extract_strided_slice %17 {offsets = [0, 0, 0], sizes = [12, 16, 4], strides = [1, 1, 1]} : vector<12x18x4xbf16> to vector<12x16x4xbf16>
    %19 = vector.extract_strided_slice %17 {offsets = [0, 1, 0], sizes = [12, 16, 4], strides = [1, 1, 1]} : vector<12x18x4xbf16> to vector<12x16x4xbf16>
    %20 = vector.extract_strided_slice %17 {offsets = [0, 2, 0], sizes = [12, 16, 4], strides = [1, 1, 1]} : vector<12x18x4xbf16> to vector<12x16x4xbf16>
    %21 = tpu.concatenate %18, %19, %20 in 2 : vector<12x16x4xbf16>, vector<12x16x4xbf16>, vector<12x16x4xbf16> -> vector<12x16x12xbf16>
    %22 = vector.extract_strided_slice %21 {offsets = [0, 0, 0], sizes = [10, 16, 12], strides = [1, 1, 1]} : vector<12x16x12xbf16> to vector<10x16x12xbf16>
    %23 = vector.shape_cast %22 : vector<10x16x12xbf16> to vector<160x12xbf16>
    %24 = vector.extract_strided_slice %13 {offsets = [0, 0], sizes = [12, 128], strides = [1, 1]} : vector<36x128xbf16> to vector<12x128xbf16>
    %cst_17 = arith.constant dense<0.000000e+00> : vector<160x128xf32>
    %25 = tpu.matmul %23, %24, %cst_17 {dimension_numbers = #tpu.dot_dimension_numbers<[1], [0], [0], [1], [0, 0, 1, 1], [], []>} : vector<160x12xbf16>, vector<12x128xbf16>, vector<160x128xf32> -> vector<160x128xf32>
    %26 = vector.extract_strided_slice %21 {offsets = [1, 0, 0], sizes = [10, 16, 12], strides = [1, 1, 1]} : vector<12x16x12xbf16> to vector<10x16x12xbf16>
    %27 = vector.shape_cast %26 : vector<10x16x12xbf16> to vector<160x12xbf16>
    %28 = vector.extract_strided_slice %13 {offsets = [12, 0], sizes = [12, 128], strides = [1, 1]} : vector<36x128xbf16> to vector<12x128xbf16>
    %cst_18 = arith.constant dense<0.000000e+00> : vector<160x128xf32>
    %29 = tpu.matmul %27, %28, %cst_18 {dimension_numbers = #tpu.dot_dimension_numbers<[1], [0], [0], [1], [0, 0, 1, 1], [], []>} : vector<160x12xbf16>, vector<12x128xbf16>, vector<160x128xf32> -> vector<160x128xf32>
    %30 = arith.addf %25, %29 : vector<160x128xf32>
    %31 = vector.extract_strided_slice %21 {offsets = [2, 0, 0], sizes = [10, 16, 12], strides = [1, 1, 1]} : vector<12x16x12xbf16> to vector<10x16x12xbf16>
    %32 = vector.shape_cast %31 : vector<10x16x12xbf16> to vector<160x12xbf16>
    %33 = vector.extract_strided_slice %13 {offsets = [24, 0], sizes = [12, 128], strides = [1, 1]} : vector<36x128xbf16> to vector<12x128xbf16>
    %cst_19 = arith.constant dense<0.000000e+00> : vector<160x128xf32>
    %34 = tpu.matmul %32, %33, %cst_19 {dimension_numbers = #tpu.dot_dimension_numbers<[1], [0], [0], [1], [0, 0, 1, 1], [], []>} : vector<160x12xbf16>, vector<12x128xbf16>, vector<160x128xf32> -> vector<160x128xf32>
    %35 = arith.addf %30, %34 : vector<160x128xf32>
    %36 = vector.broadcast %14 : vector<1x128xf32> to vector<160x128xf32>
    %37 = arith.addf %35, %36 : vector<160x128xf32>
    %cst_20 = arith.constant 0.000000e+00 : f32
    %38 = vector.broadcast %cst_20 : f32 to vector<160x128xf32>
    %39 = arith.maximumf %37, %38 : vector<160x128xf32>
    %40 = vector.shape_cast %39 : vector<160x128xf32> to vector<10x16x128xf32>
    %41 = tpu.iota {dimensions = array<i32: 0>} : vector<10x1x1xi32>
    %c0_i32_21 = arith.constant 0 : i32
    %42 = vector.broadcast %c0_i32_21 : i32 to vector<10x1x1xi32>
    %43 = arith.cmpi sgt, %41, %42 : vector<10x1x1xi32>
    %c0_i32_22 = arith.constant 0 : i32
    %44 = arith.cmpi sgt, %arg1, %c0_i32_22 : i32
    %45 = vector.broadcast %44 : i1 to vector<10x1x1xi1>
    %46 = arith.ori %43, %45 : vector<10x1x1xi1>
    %c9_i32 = arith.constant 9 : i32
    %47 = vector.broadcast %c9_i32 : i32 to vector<10x1x1xi32>
    %48 = arith.cmpi slt, %41, %47 : vector<10x1x1xi32>
    %c1_i32_23 = arith.constant 1 : i32
    %49 = arith.cmpi slt, %arg1, %c1_i32_23 : i32
    %50 = vector.broadcast %49 : i1 to vector<10x1x1xi1>
    %51 = arith.ori %48, %50 : vector<10x1x1xi1>
    %52 = arith.andi %46, %51 : vector<10x1x1xi1>
    %cst_24 = arith.constant 0.000000e+00 : f32
    %53 = vector.shape_cast %52 : vector<10x1x1xi1> to vector<10x1x1xi1>
    %54 = vector.broadcast %53 : vector<10x1x1xi1> to vector<10x16x128xi1>
    %55 = vector.broadcast %cst_24 : f32 to vector<10x16x128xf32>
    %56 = arith.select %54, %40, %55 : vector<10x16x128xi1>, vector<10x16x128xf32>
    %c0_25 = arith.constant 0 : index
    %c0_26 = arith.constant 0 : index
    %57 = vector.load %arg7[%c0_25, %c0_26] : memref<1152x128xbf16, #tpu.memory_space<vmem>>, vector<1152x128xbf16>
    %c0_27 = arith.constant 0 : index
    %c0_28 = arith.constant 0 : index
    %58 = vector.load %arg8[%c0_27, %c0_28] : memref<1x128xf32, #tpu.memory_space<vmem>>, vector<1x128xf32>
    %59 = arith.truncf %56 : vector<10x16x128xf32> to vector<10x16x128xbf16>
    %cst_29 = arith.constant 0.000000e+00 : bf16
    %60 = vector.broadcast %cst_29 : bf16 to vector<10x1x128xbf16>
    %61 = tpu.concatenate %60, %59, %60 in 1 : vector<10x1x128xbf16>, vector<10x16x128xbf16>, vector<10x1x128xbf16> -> vector<10x18x128xbf16>
    %62 = vector.extract_strided_slice %61 {offsets = [0, 0, 0], sizes = [10, 16, 128], strides = [1, 1, 1]} : vector<10x18x128xbf16> to vector<10x16x128xbf16>
    %63 = vector.extract_strided_slice %61 {offsets = [0, 1, 0], sizes = [10, 16, 128], strides = [1, 1, 1]} : vector<10x18x128xbf16> to vector<10x16x128xbf16>
    %64 = vector.extract_strided_slice %61 {offsets = [0, 2, 0], sizes = [10, 16, 128], strides = [1, 1, 1]} : vector<10x18x128xbf16> to vector<10x16x128xbf16>
    %65 = tpu.concatenate %62, %63, %64 in 2 : vector<10x16x128xbf16>, vector<10x16x128xbf16>, vector<10x16x128xbf16> -> vector<10x16x384xbf16>
    %66 = vector.extract_strided_slice %65 {offsets = [0, 0, 0], sizes = [8, 16, 384], strides = [1, 1, 1]} : vector<10x16x384xbf16> to vector<8x16x384xbf16>
    %67 = vector.shape_cast %66 : vector<8x16x384xbf16> to vector<128x384xbf16>
    %68 = vector.extract_strided_slice %57 {offsets = [0, 0], sizes = [384, 128], strides = [1, 1]} : vector<1152x128xbf16> to vector<384x128xbf16>
    %cst_30 = arith.constant dense<0.000000e+00> : vector<128x128xf32>
    %69 = tpu.matmul %67, %68, %cst_30 {dimension_numbers = #tpu.dot_dimension_numbers<[1], [0], [0], [1], [0, 0, 1, 1], [], []>} : vector<128x384xbf16>, vector<384x128xbf16>, vector<128x128xf32> -> vector<128x128xf32>
    %70 = vector.extract_strided_slice %65 {offsets = [1, 0, 0], sizes = [8, 16, 384], strides = [1, 1, 1]} : vector<10x16x384xbf16> to vector<8x16x384xbf16>
    %71 = vector.shape_cast %70 : vector<8x16x384xbf16> to vector<128x384xbf16>
    %72 = vector.extract_strided_slice %57 {offsets = [384, 0], sizes = [384, 128], strides = [1, 1]} : vector<1152x128xbf16> to vector<384x128xbf16>
    %cst_31 = arith.constant dense<0.000000e+00> : vector<128x128xf32>
    %73 = tpu.matmul %71, %72, %cst_31 {dimension_numbers = #tpu.dot_dimension_numbers<[1], [0], [0], [1], [0, 0, 1, 1], [], []>} : vector<128x384xbf16>, vector<384x128xbf16>, vector<128x128xf32> -> vector<128x128xf32>
    %74 = arith.addf %69, %73 : vector<128x128xf32>
    %75 = vector.extract_strided_slice %65 {offsets = [2, 0, 0], sizes = [8, 16, 384], strides = [1, 1, 1]} : vector<10x16x384xbf16> to vector<8x16x384xbf16>
    %76 = vector.shape_cast %75 : vector<8x16x384xbf16> to vector<128x384xbf16>
    %77 = vector.extract_strided_slice %57 {offsets = [768, 0], sizes = [384, 128], strides = [1, 1]} : vector<1152x128xbf16> to vector<384x128xbf16>
    %cst_32 = arith.constant dense<0.000000e+00> : vector<128x128xf32>
    %78 = tpu.matmul %76, %77, %cst_32 {dimension_numbers = #tpu.dot_dimension_numbers<[1], [0], [0], [1], [0, 0, 1, 1], [], []>} : vector<128x384xbf16>, vector<384x128xbf16>, vector<128x128xf32> -> vector<128x128xf32>
    %79 = arith.addf %74, %78 : vector<128x128xf32>
    %80 = vector.broadcast %58 : vector<1x128xf32> to vector<128x128xf32>
    %81 = arith.addf %79, %80 : vector<128x128xf32>
    %cst_33 = arith.constant 0.000000e+00 : f32
    %82 = vector.broadcast %cst_33 : f32 to vector<128x128xf32>
    %83 = arith.maximumf %81, %82 : vector<128x128xf32>
    %84 = vector.shape_cast %83 : vector<128x128xf32> to vector<8x16x128xf32>
    %85 = vector.shape_cast %84 : vector<8x16x128xf32> to vector<1x8x16x128xf32>
    %c0_34 = arith.constant 0 : index
    %c0_35 = arith.constant 0 : index
    %c0_36 = arith.constant 0 : index
    %c0_37 = arith.constant 0 : index
    %86 = vector.load %arg9[%c0_34, %c0_35, %c0_36, %c0_37] : memref<1x8x16x128xf32, #tpu.memory_space<vmem>>, vector<1x8x16x128xf32>
    tpu.vector_store %arg9[%c0_34, %c0_35, %c0_36, %c0_37], %85 {strides = array<i32>} : memref<1x8x16x128xf32, #tpu.memory_space<vmem>>, vector<1x8x16x128xf32>,
    %87 = vector.shape_cast %84 : vector<8x16x128xf32> to vector<4x2x16x128xf32>
    %88 = vector.extract_strided_slice %87 {offsets = [0, 0, 0, 0], sizes = [4, 1, 16, 128], strides = [1, 1, 1, 1]} : vector<4x2x16x128xf32> to vector<4x1x16x128xf32>
    %89 = vector.shape_cast %88 : vector<4x1x16x128xf32> to vector<4x16x128xf32>
    %90 = vector.extract_strided_slice %87 {offsets = [0, 1, 0, 0], sizes = [4, 1, 16, 128], strides = [1, 1, 1, 1]} : vector<4x2x16x128xf32> to vector<4x1x16x128xf32>
    %91 = vector.shape_cast %90 : vector<4x1x16x128xf32> to vector<4x16x128xf32>
    %92 = arith.maximumf %89, %91 : vector<4x16x128xf32>
    %93 = vector.shape_cast %92 : vector<4x16x128xf32> to vector<4x8x256xf32>
    %94 = vector.extract_strided_slice %93 {offsets = [0, 0, 0], sizes = [4, 8, 128], strides = [1, 1, 1]} : vector<4x8x256xf32> to vector<4x8x128xf32>
    %95 = vector.extract_strided_slice %93 {offsets = [0, 0, 128], sizes = [4, 8, 128], strides = [1, 1, 1]} : vector<4x8x256xf32> to vector<4x8x128xf32>
    %96 = arith.maximumf %94, %95 : vector<4x8x128xf32>
    %97 = vector.shape_cast %96 : vector<4x8x128xf32> to vector<1x4x8x128xf32>
    %c0_38 = arith.constant 0 : index
    %c0_39 = arith.constant 0 : index
    %c0_40 = arith.constant 0 : index
    %c0_41 = arith.constant 0 : index
    %98 = vector.load %arg10[%c0_38, %c0_39, %c0_40, %c0_41] : memref<1x4x8x128xf32, #tpu.memory_space<vmem>>, vector<1x4x8x128xf32>
    tpu.vector_store %arg10[%c0_38, %c0_39, %c0_40, %c0_41], %97 {strides = array<i32>} : memref<1x4x8x128xf32, #tpu.memory_space<vmem>>, vector<1x4x8x128xf32>,
    return
  }
  func.func @transform_0(%arg0: i32, %arg1: i32) -> (i32, i32, i32, i32) {
    %c4_i32 = arith.constant 4 : i32
    %0 = arith.muli %arg1, %c4_i32 : i32
    %c1_i32 = arith.constant 1 : i32
    %1 = arith.subi %0, %c1_i32 : i32
    %c0_i32 = arith.constant 0 : i32
    %2 = arith.maxsi %1, %c0_i32 : i32
    %c0_i32_0 = arith.constant 0 : i32
    %c0_i32_1 = arith.constant 0 : i32
    %c0_i32_2 = arith.constant 0 : i32
    return %arg0, %2, %c0_i32_0, %c0_i32_1 : i32, i32, i32, i32
  }
  func.func @transform_1(%arg0: i32, %arg1: i32) -> (i32, i32, i32, i32) {
    %c0_i32 = arith.constant 0 : i32
    %c0_i32_0 = arith.constant 0 : i32
    %c0_i32_1 = arith.constant 0 : i32
    return %arg0, %arg1, %c0_i32, %c0_i32_0 : i32, i32, i32, i32
  }
  func.func @transform_2(%arg0: i32, %arg1: i32) -> (i32, i32, i32, i32) {
    %c4_i32 = arith.constant 4 : i32
    %0 = arith.muli %arg1, %c4_i32 : i32
    %c4_i32_0 = arith.constant 4 : i32
    %1 = arith.addi %0, %c4_i32_0 : i32
    %c7_i32 = arith.constant 7 : i32
    %2 = arith.minsi %1, %c7_i32 : i32
    %c0_i32 = arith.constant 0 : i32
    %c0_i32_1 = arith.constant 0 : i32
    %c0_i32_2 = arith.constant 0 : i32
    return %arg0, %2, %c0_i32, %c0_i32_1 : i32, i32, i32, i32
  }
  func.func @transform_3(%arg0: i32, %arg1: i32) -> (i32, i32) {
    %c0_i32 = arith.constant 0 : i32
    %c0_i32_0 = arith.constant 0 : i32
    %c0_i32_1 = arith.constant 0 : i32
    return %c0_i32, %c0_i32_0 : i32, i32
  }
  func.func @transform_4(%arg0: i32, %arg1: i32) -> (i32, i32) {
    %c0_i32 = arith.constant 0 : i32
    %c0_i32_0 = arith.constant 0 : i32
    %c0_i32_1 = arith.constant 0 : i32
    return %c0_i32, %c0_i32_0 : i32, i32
  }
  func.func @transform_5(%arg0: i32, %arg1: i32) -> (i32, i32) {
    %c0_i32 = arith.constant 0 : i32
    %c0_i32_0 = arith.constant 0 : i32
    %c0_i32_1 = arith.constant 0 : i32
    return %c0_i32, %c0_i32_0 : i32, i32
  }
  func.func @transform_6(%arg0: i32, %arg1: i32) -> (i32, i32) {
    %c0_i32 = arith.constant 0 : i32
    %c0_i32_0 = arith.constant 0 : i32
    %c0_i32_1 = arith.constant 0 : i32
    return %c0_i32, %c0_i32_0 : i32, i32
  }
  func.func @transform_7(%arg0: i32, %arg1: i32) -> (i32, i32, i32, i32) {
    %c0_i32 = arith.constant 0 : i32
    %c0_i32_0 = arith.constant 0 : i32
    %c0_i32_1 = arith.constant 0 : i32
    return %arg0, %arg1, %c0_i32, %c0_i32_0 : i32, i32, i32, i32
  }
  func.func @transform_8(%arg0: i32, %arg1: i32) -> (i32, i32, i32, i32) {
    %c0_i32 = arith.constant 0 : i32
    %c0_i32_0 = arith.constant 0 : i32
    %c0_i32_1 = arith.constant 0 : i32
    return %arg0, %arg1, %c0_i32, %c0_i32_0 : i32, i32, i32, i32
  }
}

</mosaic_0001>

<llo_original>
// kernel: downsample_forward.1
$region0: #{downsample_forward.1}
  #allocation0 [shape = 'u32[]', space=smem, size = 0x4, offset = 0x4, fixed_abs, tag = 'smem constant byte address 0x4 - core index']
  #allocation1 [shape = 'u32[144,128]{1,0:T(1,128)}', space=vmem, size = 0x12000, scoped, tag = 'internal scratch']
  %s0 = inlined_call_operand.vmem [shape: f32[2,16,16,4], index: 0, kind: input, shape index: {}, may-alias: {0,1,2}]
  %s1 = inlined_call_operand.vmem [shape: f32[2,16,16,4], index: 1, kind: input, shape index: {}, may-alias: {0,1,2}]
  %s2 = inlined_call_operand.vmem [shape: f32[2,16,16,4], index: 2, kind: input, shape index: {}, may-alias: {0,1,2}]
  %s3 = inlined_call_operand.vmem [shape: bf16[36,128], index: 3, kind: input, shape index: {}]
  %s4 = inlined_call_operand.vmem [shape: f32[1,128], index: 4, kind: input, shape index: {}]
  %s5 = inlined_call_operand.vmem [shape: bf16[1152,128], index: 5, kind: input, shape index: {}]
  %s6 = inlined_call_operand.vmem [shape: f32[1,128], index: 6, kind: input, shape index: {}]
  %s7 = inlined_call_operand.vmem [shape: f32[2,16,16,128], index: 7, kind: output, shape index: {0}]
  %s8 = inlined_call_operand.vmem [shape: f32[2,8,8,128], index: 8, kind: output, shape index: {1}]
  %9 = xla_tuple %s7, %s8
  %s10 = sld [smem:[#allocation0]]
  $region69: #{downsample_forward.1} parent=0
    _
  %s12 = ssub.s32 1, %s10
  %s13 = scalar_select 0, %s12, %s10
  loop: start=0, step=1, limit=6
  $region2: #{downsample_forward.1} parent=0 // loop_pre_header
    _
  $region3: #{downsample_forward.1} parent=0 // loop_header
    %s15 = sphi 0, %s19
    %p16 = scmp.ge.s32.totalorder %s15, 6
    %s22 = sphi 0, %s34
    %s23 = sphi 0, %s30
    %s24 = sphi 0, %s22
    %s25 = sphi 0, %s23
    %s26 = sphi 0, %s24
    %s27 = sphi 0, %s25
    %s47 = sphi 0, %s49
    %s50 = sphi 0, %s47
    %s51 = sphi 0, %s50
    %s67 = sphi 0, %s51
    %s75 = sphi 0, %s77
    %s78 = sphi 0, %s75
    %s79 = sphi 0, %s78
    %s95 = sphi 0, %s79
    %s111 = sphi 0, %s113
    %s114 = sphi 0, %s111
    %s115 = sphi 0, %s114
    %s131 = sphi 0, %s115
    %s135 = sphi 0, %s135
    %s137 = sphi 0, %s135
    %s138 = sphi 0, %s137
    %s152 = sphi 0, %s138
    %s156 = sphi 0, %s156
    %s158 = sphi 0, %s156
    %s159 = sphi 0, %s158
    %s173 = sphi 0, %s159
    %s177 = sphi 0, %s177
    %s179 = sphi 0, %s177
    %s180 = sphi 0, %s179
    %s194 = sphi 0, %s180
    %s198 = sphi 0, %s198
    %s200 = sphi 0, %s198
    %s201 = sphi 0, %s200
    %s215 = sphi 0, %s201
    %s223 = sphi 0, %s225
    %s226 = sphi 0, %s223
    %s227 = sphi 0, %s226
    %s243 = sphi 0, %s227
    %s251 = sphi 0, %s253
    %s254 = sphi 0, %s251
    %s255 = sphi 0, %s254
    %s271 = sphi 0, %s255
  $region4: #{downsample_forward.1} parent=0 // loop_header_branch
    %18 = sbr.rel (%p16) target = $region8
  $region5: #{downsample_forward.1} parent=0 // loop_body
    %s20 = ssub.s32 %s15, 1
    %s21 = ssub.s32 %s15, 2
    %s28 = sadd.s32 1, %s23
    %p29 = scmp.ge.s32.totalorder %s28, 2
    %s30 = scalar_select %p29, 0, %s28
    %s31 = sadd.s32 1, %s22
    %s32 = scalar_select %p29, %s31, %s22
    %p33 = scmp.ge.s32.totalorder %s32, 2
    %s34 = scalar_select %p33, 0, %s32
    %s35 = smul.u32 %s23, 4
    %s36 = ssub.s32 %s35, 1
    %p37 = scmp.gt.s32.totalorder %s36, 0
    %s38 = scalar_select %p37, %s36, 0
    %s39 = smul.u32 %s30, 4
    %s40 = ssub.s32 %s39, 1
    %p41 = scmp.gt.s32.totalorder %s40, 0
    %s42 = scalar_select %p41, %s40, 0
    %s43 = ssub.s32 %s22, %s34
    %s44 = ssub.s32 %s38, %s42
    %s45 = sor.u32 %s43, %s44
    %p46 = scmp.eq.s32.totalorder %s45, 0
    %s48 = sadd.s32 %s47, 1
    %s49 = scalar_select %p46, %s47, %s48
    %p52 = pneg %p46
    %p53 = scmp.eq.s32.totalorder %s15, 3
    %p54 = por %p52, %p53
    %p55 = scmp.ne.s32.totalorder %s47, %s50
    %p56 = scmp.eq.s32.totalorder %s15, 0
    %p57 = por %p55, %p56
    %p58 = scmp.ne.s32.totalorder %s47, %s50
    %p59 = scmp.eq.s32.totalorder %s20, 3
    %p60 = por %p58, %p59
    %p61 = scmp.ne.s32.totalorder %s50, %s51
    %p62 = scmp.eq.s32.totalorder %s20, 0
    %p63 = por %p61, %p62
    %p64 = scmp.ne.s32.totalorder %s50, %s51
    %p65 = scmp.eq.s32.totalorder %s21, 3
    %p66 = por %p64, %p65
    %p68 = scmp.ne.s32.totalorder %s51, %s67
    %p69 = scmp.eq.s32.totalorder %s21, 0
    %p70 = por %p68, %p69
    %s71 = ssub.s32 %s22, %s34
    %s72 = ssub.s32 %s23, %s30
    %s73 = sor.u32 %s71, %s72
    %p74 = scmp.eq.s32.totalorder %s73, 0
    %s76 = sadd.s32 %s75, 1
    %s77 = scalar_select %p74, %s75, %s76
    %p80 = pneg %p74
    %p81 = scmp.eq.s32.totalorder %s15, 3
    %p82 = por %p80, %p81
    %p83 = scmp.ne.s32.totalorder %s75, %s78
    %p84 = scmp.eq.s32.totalorder %s15, 0
    %p85 = por %p83, %p84
    %p86 = scmp.ne.s32.totalorder %s75, %s78
    %p87 = scmp.eq.s32.totalorder %s20, 3
    %p88 = por %p86, %p87
    %p89 = scmp.ne.s32.totalorder %s78, %s79
    %p90 = scmp.eq.s32.totalorder %s20, 0
    %p91 = por %p89, %p90
    %p92 = scmp.ne.s32.totalorder %s78, %s79
    %p93 = scmp.eq.s32.totalorder %s21, 3
    %p94 = por %p92, %p93
    %p96 = scmp.ne.s32.totalorder %s79, %s95
    %p97 = scmp.eq.s32.totalorder %s21, 0
    %p98 = por %p96, %p97
    %s99 = smul.u32 %s23, 4
    %s100 = sadd.s32 %s99, 4
    %p101 = scmp.lt.s32.totalorder %s100, 7
    %s102 = scalar_select %p101, %s100, 7
    %s103 = smul.u32 %s30, 4
    %s104 = sadd.s32 %s103, 4
    %p105 = scmp.lt.s32.totalorder %s104, 7
    %s106 = scalar_select %p105, %s104, 7
    %s107 = ssub.s32 %s22, %s34
    %s108 = ssub.s32 %s102, %s106
    %s109 = sor.u32 %s107, %s108
    %p110 = scmp.eq.s32.totalorder %s109, 0
    %s112 = sadd.s32 %s111, 1
    %s113 = scalar_select %p110, %s111, %s112
    %p116 = pneg %p110
    %p117 = scmp.eq.s32.totalorder %s15, 3
    %p118 = por %p116, %p117
    %p119 = scmp.ne.s32.totalorder %s111, %s114
    %p120 = scmp.eq.s32.totalorder %s15, 0
    %p121 = por %p119, %p120
    %p122 = scmp.ne.s32.totalorder %s111, %s114
    %p123 = scmp.eq.s32.totalorder %s20, 3
    %p124 = por %p122, %p123
    %p125 = scmp.ne.s32.totalorder %s114, %s115
    %p126 = scmp.eq.s32.totalorder %s20, 0
    %p127 = por %p125, %p126
    %p128 = scmp.ne.s32.totalorder %s114, %s115
    %p129 = scmp.eq.s32.totalorder %s21, 3
    %p130 = por %p128, %p129
    %p132 = scmp.ne.s32.totalorder %s115, %s131
    %p133 = scmp.eq.s32.totalorder %s21, 0
    %p134 = por %p132, %p133
    %s136 = sadd.s32 %s135, 1
    %p139 = scmp.eq.s32.totalorder %s15, 3
    %p140 = scmp.ne.s32.totalorder %s135, %s137
    %p141 = scmp.eq.s32.totalorder %s15, 0
    %p142 = por %p140, %p141
    %p143 = scmp.ne.s32.totalorder %s135, %s137
    %p144 = scmp.eq.s32.totalorder %s20, 3
    %p145 = por %p143, %p144
    %p146 = scmp.ne.s32.totalorder %s137, %s138
    %p147 = scmp.eq.s32.totalorder %s20, 0
    %p148 = por %p146, %p147
    %p149 = scmp.ne.s32.totalorder %s137, %s138
    %p150 = scmp.eq.s32.totalorder %s21, 3
    %p151 = por %p149, %p150
    %p153 = scmp.ne.s32.totalorder %s138, %s152
    %p154 = scmp.eq.s32.totalorder %s21, 0
    %p155 = por %p153, %p154
    %s157 = sadd.s32 %s156, 1
    %p160 = scmp.eq.s32.totalorder %s15, 3
    %p161 = scmp.ne.s32.totalorder %s156, %s158
    %p162 = scmp.eq.s32.totalorder %s15, 0
    %p163 = por %p161, %p162
    %p164 = scmp.ne.s32.totalorder %s156, %s158
    %p165 = scmp.eq.s32.totalorder %s20, 3
    %p166 = por %p164, %p165
    %p167 = scmp.ne.s32.totalorder %s158, %s159
    %p168 = scmp.eq.s32.totalorder %s20, 0
    %p169 = por %p167, %p168
    %p170 = scmp.ne.s32.totalorder %s158, %s159
    %p171 = scmp.eq.s32.totalorder %s21, 3
    %p172 = por %p170, %p171
    %p174 = scmp.ne.s32.totalorder %s159, %s173
    %p175 = scmp.eq.s32.totalorder %s21, 0
    %p176 = por %p174, %p175
    %s178 = sadd.s32 %s177, 1
    %p181 = scmp.eq.s32.totalorder %s15, 3
    %p182 = scmp.ne.s32.totalorder %s177, %s179
    %p183 = scmp.eq.s32.totalorder %s15, 0
    %p184 = por %p182, %p183
    %p185 = scmp.ne.s32.totalorder %s177, %s179
    %p186 = scmp.eq.s32.totalorder %s20, 3
    %p187 = por %p185, %p186
    %p188 = scmp.ne.s32.totalorder %s179, %s180
    %p189 = scmp.eq.s32.totalorder %s20, 0
    %p190 = por %p188, %p189
    %p191 = scmp.ne.s32.totalorder %s179, %s180
    %p192 = scmp.eq.s32.totalorder %s21, 3
    %p193 = por %p191, %p192
    %p195 = scmp.ne.s32.totalorder %s180, %s194
    %p196 = scmp.eq.s32.totalorder %s21, 0
    %p197 = por %p195, %p196
    %s199 = sadd.s32 %s198, 1
    %p202 = scmp.eq.s32.totalorder %s15, 3
    %p203 = scmp.ne.s32.totalorder %s198, %s200
    %p204 = scmp.eq.s32.totalorder %s15, 0
    %p205 = por %p203, %p204
    %p206 = scmp.ne.s32.totalorder %s198, %s200
    %p207 = scmp.eq.s32.totalorder %s20, 3
    %p208 = por %p206, %p207
    %p209 = scmp.ne.s32.totalorder %s200, %s201
    %p210 = scmp.eq.s32.totalorder %s20, 0
    %p211 = por %p209, %p210
    %p212 = scmp.ne.s32.totalorder %s200, %s201
    %p213 = scmp.eq.s32.totalorder %s21, 3
    %p214 = por %p212, %p213
    %p216 = scmp.ne.s32.totalorder %s201, %s215
    %p217 = scmp.eq.s32.totalorder %s21, 0
    %p218 = por %p216, %p217
    %s219 = ssub.s32 %s22, %s34
    %s220 = ssub.s32 %s23, %s30
    %s221 = sor.u32 %s219, %s220
    %p222 = scmp.eq.s32.totalorder %s221, 0
    %s224 = sadd.s32 %s223, 1
    %s225 = scalar_select %p222, %s223, %s224
    %p228 = pneg %p222
    %p229 = scmp.eq.s32.totalorder %s15, 3
    %p230 = por %p228, %p229
    %p231 = scmp.ne.s32.totalorder %s223, %s226
    %p232 = scmp.eq.s32.totalorder %s15, 0
    %p233 = por %p231, %p232
    %p234 = scmp.ne.s32.totalorder %s223, %s226
    %p235 = scmp.eq.s32.totalorder %s20, 3
    %p236 = por %p234, %p235
    %p237 = scmp.ne.s32.totalorder %s226, %s227
    %p238 = scmp.eq.s32.totalorder %s20, 0
    %p239 = por %p237, %p238
    %p240 = scmp.ne.s32.totalorder %s226, %s227
    %p241 = scmp.eq.s32.totalorder %s21, 3
    %p242 = por %p240, %p241
    %p244 = scmp.ne.s32.totalorder %s227, %s243
    %p245 = scmp.eq.s32.totalorder %s21, 0
    %p246 = por %p244, %p245
    %s247 = ssub.s32 %s22, %s34
    %s248 = ssub.s32 %s23, %s30
    %s249 = sor.u32 %s247, %s248
    %p250 = scmp.eq.s32.totalorder %s249, 0
    %s252 = sadd.s32 %s251, 1
    %s253 = scalar_select %p250, %s251, %s252
    %p256 = pneg %p250
    %p257 = scmp.eq.s32.totalorder %s15, 3
    %p258 = por %p256, %p257
    %p259 = scmp.ne.s32.totalorder %s251, %s254
    %p260 = scmp.eq.s32.totalorder %s15, 0
    %p261 = por %p259, %p260
    %p262 = scmp.ne.s32.totalorder %s251, %s254
    %p263 = scmp.eq.s32.totalorder %s20, 3
    %p264 = por %p262, %p263
    %p265 = scmp.ne.s32.totalorder %s254, %s255
    %p266 = scmp.eq.s32.totalorder %s20, 0
    %p267 = por %p265, %p266
    %p268 = scmp.ne.s32.totalorder %s254, %s255
    %p269 = scmp.eq.s32.totalorder %s21, 3
    %p270 = por %p268, %p269
    %p272 = scmp.ne.s32.totalorder %s255, %s271
    %p273 = scmp.eq.s32.totalorder %s21, 0
    %p274 = por %p272, %p273
    %p275 = scmp.le.s32.totalorder 1, %s15
    %p276 = scmp.lt.s32.totalorder %s15, 5
    %p277 = pnand %p275, %p276
    %p278 = pneg %p277
    // Predicated region
    $region9: #{downsample_forward.1} parent=5 // pred_check
      _
    $region10: #{downsample_forward.1} parent=5 // pred_check_branch
      %280 = sbr.rel (%p277) target = $region12
    $region11: #{downsample_forward.1} parent=5 // pred_region
      %s281 = ssub.s32 %s15, 1
      // Predicated region
      $region13: #{downsample_forward.1} parent=11 // pred_check
        %p282 = pneg %p148
      $region14: #{downsample_forward.1} parent=11 // pred_check_branch
        %284 = sbr.rel (%p282) target = $region16
      $region15: #{downsample_forward.1} parent=11 // pred_region
        _
      $region16: #{downsample_forward.1} parent=11 // pred_fallthru
        _
      // Predicated region
      $region17: #{downsample_forward.1} parent=11 // pred_check
        %p285 = pneg %p169
      $region18: #{downsample_forward.1} parent=11 // pred_check_branch
        %287 = sbr.rel (%p285) target = $region20
      $region19: #{downsample_forward.1} parent=11 // pred_region
        _
      $region20: #{downsample_forward.1} parent=11 // pred_fallthru
        _
      // Predicated region
      $region21: #{downsample_forward.1} parent=11 // pred_check
        %p288 = pneg %p190
      $region22: #{downsample_forward.1} parent=11 // pred_check_branch
        %290 = sbr.rel (%p288) target = $region24
      $region23: #{downsample_forward.1} parent=11 // pred_region
        _
      $region24: #{downsample_forward.1} parent=11 // pred_fallthru
        _
      // Predicated region
      $region25: #{downsample_forward.1} parent=11 // pred_check
        %p291 = pneg %p211
      $region26: #{downsample_forward.1} parent=11 // pred_check_branch
        %293 = sbr.rel (%p291) target = $region28
      $region27: #{downsample_forward.1} parent=11 // pred_region
        _
      $region28: #{downsample_forward.1} parent=11 // pred_fallthru
        _
    $region12: #{downsample_forward.1} parent=5 // pred_fallthru
      _
    %p294 = scmp.lt.s32.totalorder %s15, 4
    // Predicated region
    $region29: #{downsample_forward.1} parent=5 // pred_check
      %p295 = pneg %p294
    $region30: #{downsample_forward.1} parent=5 // pred_check_branch
      %297 = sbr.rel (%p295) target = $region32
    $region31: #{downsample_forward.1} parent=5 // pred_region
      // Predicated region
      $region33: #{downsample_forward.1} parent=31 // pred_check
        %p298 = pneg %p57
      $region34: #{downsample_forward.1} parent=31 // pred_check_branch
        %300 = sbr.rel (%p298) target = $region36
      $region35: #{downsample_forward.1} parent=31 // pred_region
        %s301 = smul.u32 %s23, 4
        %s302 = ssub.s32 %s301, 1
        %p303 = scmp.gt.s32.totalorder %s302, 0
        %s304 = scalar_select %p303, %s302, 0
        %s305 = smul.u32 2, %s304
        %p306 = scmp.lt.s32.totalorder %s22, 1
        %s307 = scalar_select %p306, %s22, 1
        %p308 = scmp.lt.s32.totalorder %s305, 15
        %s309 = scalar_select %p308, %s305, 15
        %s310 = smul.addr %s309, 2
        %s311 = smul.addr %s307, 32
        %s312 = sadd.s32 %s310, %s311
        %s313 = smul.addr %s312, 8
        %s314 = scalar_lea.vmem %s0, %s313
        %s315 = smul.u32 %s23, 4
        %s316 = ssub.s32 %s315, 1
        %p317 = scmp.gt.s32.totalorder %s316, 0
        %s318 = scalar_select %p317, %s316, 0
        %s319 = smul.u32 2, %s318
      $region36: #{downsample_forward.1} parent=31 // pred_fallthru
        _
      // Predicated region
      $region37: #{downsample_forward.1} parent=31 // pred_check
        %p320 = pneg %p85
      $region38: #{downsample_forward.1} parent=31 // pred_check_branch
        %322 = sbr.rel (%p320) target = $region40
      $region39: #{downsample_forward.1} parent=31 // pred_region
        %s323 = smul.u32 8, %s23
        %p324 = scmp.lt.s32.totalorder %s22, 1
        %s325 = scalar_select %p324, %s22, 1
        %p326 = scmp.lt.s32.totalorder %s323, 15
        %s327 = scalar_select %p326, %s323, 15
        %s328 = smul.addr %s327, 2
        %s329 = smul.addr %s325, 32
        %s330 = sadd.s32 %s328, %s329
        %s331 = smul.addr %s330, 8
        %s332 = scalar_lea.vmem %s1, %s331
        %s333 = smul.u32 8, %s23
      $region40: #{downsample_forward.1} parent=31 // pred_fallthru
        _
      // Predicated region
      $region41: #{downsample_forward.1} parent=31 // pred_check
        %p334 = pneg %p121
      $region42: #{downsample_forward.1} parent=31 // pred_check_branch
        %336 = sbr.rel (%p334) target = $region44
      $region43: #{downsample_forward.1} parent=31 // pred_region
        %s337 = smul.u32 %s23, 4
        %s338 = sadd.s32 %s337, 4
        %p339 = scmp.lt.s32.totalorder %s338, 7
        %s340 = scalar_select %p339, %s338, 7
        %s341 = smul.u32 2, %s340
        %p342 = scmp.lt.s32.totalorder %s22, 1
        %s343 = scalar_select %p342, %s22, 1
        %p344 = scmp.lt.s32.totalorder %s341, 15
        %s345 = scalar_select %p344, %s341, 15
        %s346 = smul.addr %s345, 2
        %s347 = smul.addr %s343, 32
        %s348 = sadd.s32 %s346, %s347
        %s349 = smul.addr %s348, 8
        %s350 = scalar_lea.vmem %s2, %s349
        %s351 = smul.u32 %s23, 4
        %s352 = sadd.s32 %s351, 4
        %p353 = scmp.lt.s32.totalorder %s352, 7
        %s354 = scalar_select %p353, %s352, 7
        %s355 = smul.u32 2, %s354
      $region44: #{downsample_forward.1} parent=31 // pred_fallthru
        _
    $region32: #{downsample_forward.1} parent=5 // pred_fallthru
      _
    %p356 = scmp.le.s32.totalorder 1, %s15
    %p357 = scmp.lt.s32.totalorder %s15, 5
    %p358 = pnand %p356, %p357
    %p359 = pneg %p358
    // Predicated region
    $region45: #{downsample_forward.1} parent=5 // pred_check
      _
    $region46: #{downsample_forward.1} parent=5 // pred_check_branch
      %361 = sbr.rel (%p358) target = $region48
    $region47: #{downsample_forward.1} parent=5 // pred_region
      %s362 = ssub.s32 %s15, 1
      %s363 = smul.u32 %s25, 4
      %s364 = ssub.s32 %s363, 1
      %p365 = scmp.gt.s32.totalorder %s364, 0
      %s366 = scalar_select %p365, %s364, 0
      %s367 = smul.u32 2, %s366
      %p368 = scmp.lt.s32.totalorder %s24, 1
      %s369 = scalar_select %p368, %s24, 1
      %p370 = scmp.lt.s32.totalorder %s367, 15
      %s371 = scalar_select %p370, %s367, 15
      %s372 = smul.addr %s371, 2
      %s373 = smul.addr %s369, 32
      %s374 = sadd.s32 %s372, %s373
      %s375 = smul.addr %s374, 8
      %s376 = scalar_lea.vmem %s0, %s375
      %p377 = pneg %p63
      %p378 = pneg %p60
      %s379 = smul.u32 8, %s25
      %p380 = scmp.lt.s32.totalorder %s24, 1
      %s381 = scalar_select %p380, %s24, 1
      %p382 = scmp.lt.s32.totalorder %s379, 15
      %s383 = scalar_select %p382, %s379, 15
      %s384 = smul.addr %s383, 2
      %s385 = smul.addr %s381, 32
      %s386 = sadd.s32 %s384, %s385
      %s387 = smul.addr %s386, 8
      %s388 = scalar_lea.vmem %s1, %s387
      %p389 = pneg %p91
      %p390 = pneg %p88
      %s391 = smul.u32 %s25, 4
      %s392 = sadd.s32 %s391, 4
      %p393 = scmp.lt.s32.totalorder %s392, 7
      %s394 = scalar_select %p393, %s392, 7
      %s395 = smul.u32 2, %s394
      %p396 = scmp.lt.s32.totalorder %s24, 1
      %s397 = scalar_select %p396, %s24, 1
      %p398 = scmp.lt.s32.totalorder %s395, 15
      %s399 = scalar_select %p398, %s395, 15
      %s400 = smul.addr %s399, 2
      %s401 = smul.addr %s397, 32
      %s402 = sadd.s32 %s400, %s401
      %s403 = smul.addr %s402, 8
      %s404 = scalar_lea.vmem %s2, %s403
      %p405 = pneg %p127
      %p406 = pneg %p124
      %p407 = pneg %p148
      %p408 = pneg %p145
      %p409 = pneg %p169
      %p410 = pneg %p166
      %p411 = pneg %p190
      %p412 = pneg %p187
      %p413 = pneg %p211
      %p414 = pneg %p208
      %p415 = pneg %p239
      %p416 = pneg %p236
      %s417 = smul.u32 8, %s25
      %p418 = scmp.lt.s32.totalorder %s24, 1
      %s419 = scalar_select %p418, %s24, 1
      %p420 = scmp.lt.s32.totalorder %s417, 15
      %s421 = scalar_select %p420, %s417, 15
      %s422 = smul.addr %s421, 2
      %s423 = smul.addr %s419, 32
      %s424 = sadd.s32 %s422, %s423
      %s425 = smul.addr %s424, 8
      %s426 = scalar_lea.vmem %s7, %s425
      %p427 = pneg %p267
      %p428 = pneg %p264
      %s429 = smul.u32 4, %s25
      %p430 = scmp.lt.s32.totalorder %s24, 1
      %s431 = scalar_select %p430, %s24, 1
      %p432 = scmp.lt.s32.totalorder %s429, 7
      %s433 = scalar_select %p432, %s429, 7
      %s434 = smul.addr %s431, 8
      %s435 = sadd.s32 %s433, %s434
      %s436 = smul.addr %s435, 8
      %s437 = scalar_lea.vmem %s8, %s436
      %s438 = smul.u32 %s25, 4
      %s439 = ssub.s32 %s438, 1
      %p440 = scmp.gt.s32.totalorder %s439, 0
      %s441 = scalar_select %p440, %s439, 0
      %s442 = smul.u32 2, %s441
      %p443 = scmp.lt.s32.totalorder %s24, 1
      %s444 = scalar_select %p443, %s24, 1
      %p445 = scmp.lt.s32.totalorder %s442, 15
      %s446 = scalar_select %p445, %s442, 15
      %s447 = smul.addr %s446, 2
      %s448 = smul.addr %s444, 32
      %s449 = sadd.s32 %s447, %s448
      %s450 = smul.addr %s449, 8
      %s451 = scalar_lea.vmem %s0, %s450
      %s452 = smul.u32 %s25, 4
      %s453 = ssub.s32 %s452, 1
      %p454 = scmp.gt.s32.totalorder %s453, 0
      %s455 = scalar_select %p454, %s453, 0
      %s456 = smul.u32 2, %s455
      %s457 = smul.u32 8, %s25
      %p458 = scmp.lt.s32.totalorder %s24, 1
      %s459 = scalar_select %p458, %s24, 1
      %p460 = scmp.lt.s32.totalorder %s457, 15
      %s461 = scalar_select %p460, %s457, 15
      %s462 = smul.addr %s461, 2
      %s463 = smul.addr %s459, 32
      %s464 = sadd.s32 %s462, %s463
      %s465 = smul.addr %s464, 8
      %s466 = scalar_lea.vmem %s1, %s465
      %s467 = smul.u32 8, %s25
      %s468 = smul.u32 %s25, 4
      %s469 = sadd.s32 %s468, 4
      %p470 = scmp.lt.s32.totalorder %s469, 7
      %s471 = scalar_select %p470, %s469, 7
      %s472 = smul.u32 2, %s471
      %p473 = scmp.lt.s32.totalorder %s24, 1
      %s474 = scalar_select %p473, %s24, 1
      %p475 = scmp.lt.s32.totalorder %s472, 15
      %s476 = scalar_select %p475, %s472, 15
      %s477 = smul.addr %s476, 2
      %s478 = smul.addr %s474, 32
      %s479 = sadd.s32 %s477, %s478
      %s480 = smul.addr %s479, 8
      %s481 = scalar_lea.vmem %s2, %s480
      %s482 = smul.u32 %s25, 4
      %s483 = sadd.s32 %s482, 4
      %p484 = scmp.lt.s32.totalorder %s483, 7
      %s485 = scalar_select %p484, %s483, 7
      %s486 = smul.u32 2, %s485
      %s487 = smul.u32 8, %s25
      %p488 = scmp.lt.s32.totalorder %s24, 1
      %s489 = scalar_select %p488, %s24, 1
      %p490 = scmp.lt.s32.totalorder %s487, 15
      %s491 = scalar_select %p490, %s487, 15
      %s492 = smul.addr %s491, 2
      %s493 = smul.addr %s489, 32
      %s494 = sadd.s32 %s492, %s493
      %s495 = smul.addr %s494, 8
      %s496 = scalar_lea.vmem %s7, %s495
      %s497 = smul.u32 8, %s25
      %s498 = smul.u32 4, %s25
      %p499 = scmp.lt.s32.totalorder %s24, 1
      %s500 = scalar_select %p499, %s24, 1
      %p501 = scmp.lt.s32.totalorder %s498, 7
      %s502 = scalar_select %p501, %s498, 7
      %s503 = smul.addr %s500, 8
      %s504 = sadd.s32 %s502, %s503
      %s505 = smul.addr %s504, 8
      %s506 = scalar_lea.vmem %s8, %s505
      %s507 = smul.u32 4, %s25
      %p509 = scmp.gt.s32.totalorder %s25, 0
      %v510 = vld [vmem:[%s451] sm:$0xff]
      %v511 = vld [vmem:[%s451 + $0x8] sm:$0xff]
      %v512 = vld [vmem:[%s451 + $0x10] sm:$0xff]
      %v513 = vld [vmem:[%s451 + $0x18] sm:$0xff]
      %s514 = scalar_select %p509, 1, 0
      %v515 = vstv %s514
      %vm516 = vcmp.eq.s32.totalorder %v515, 1
      %v517 = vsel %vm516, %v510, 0.0
      %v518 = vsel %vm516, %v511, 0.0
      %v519 = vsel %vm516, %v512, 0.0
      %v520 = vsel %vm516, %v513, 0.0
      %p521 = scmp.lt.s32.totalorder %s25, 1
      %v522 = vld [vmem:[%s481] sm:$0xff]
      %v523 = vld [vmem:[%s481 + $0x8] sm:$0xff]
      %v524 = vld [vmem:[%s481 + $0x10] sm:$0xff]
      %v525 = vld [vmem:[%s481 + $0x18] sm:$0xff]
      %s526 = scalar_select %p521, 1, 0
      %v527 = vstv %s526
      %vm528 = vcmp.eq.s32.totalorder %v527, 1
      %v529 = vsel %vm528, %v522, 0.0
      %v530 = vsel %vm528, %v523, 0.0
      %v531 = vsel %vm528, %v524, 0.0
      %v532 = vsel %vm528, %v525, 0.0
      %v533 = vld [vmem:[%s466] sm:$0xff]
      %v534 = vld [vmem:[%s466 + $0x8] sm:$0xff]
      %v535 = vld [vmem:[%s466 + $0x10] sm:$0xff]
      %v536 = vld [vmem:[%s466 + $0x18] sm:$0xff]
      %v537 = vld [vmem:[%s466 + $0x20] sm:$0xff]
      %v538 = vld [vmem:[%s466 + $0x28] sm:$0xff]
      %v539 = vld [vmem:[%s466 + $0x30] sm:$0xff]
      %v540 = vld [vmem:[%s466 + $0x38] sm:$0xff]
      %v541 = vld [vmem:[%s466 + $0x40] sm:$0xff]
      %v542 = vld [vmem:[%s466 + $0x48] sm:$0xff]
      %v543 = vld [vmem:[%s466 + $0x50] sm:$0xff]
      %v544 = vld [vmem:[%s466 + $0x58] sm:$0xff]
      %v545 = vld [vmem:[%s466 + $0x60] sm:$0xff]
      %v546 = vld [vmem:[%s466 + $0x68] sm:$0xff]
      %v547 = vld [vmem:[%s466 + $0x70] sm:$0xff]
      %v548 = vld [vmem:[%s466 + $0x78] sm:$0xff]
      %v549 = vld [vmem:[%s3] sm:$0xf]
      %v550 = vld [vmem:[%s3 + $0x4] sm:$0xf]
      %v551 = vld [vmem:[%s3 + $0x8] sm:$0xf]
      %v552 = vld [vmem:[%s3 + $0xc] sm:$0xf]
      %v553 = vld [vmem:[%s3 + $0x10] sm:$0x3]
      %v554 = vld [vmem:[%s4] sm:$0x1]
      %v555 = vpack.c.bf16 %v518, %v517
      %v556 = vpack.c.bf16 %v520, %v519
      %v557 = vpack.c.bf16 %v534, %v533
      %v558 = vpack.c.bf16 %v536, %v535
      %v559 = vpack.c.bf16 %v538, %v537
      %v560 = vpack.c.bf16 %v540, %v539
      %v561 = vpack.c.bf16 %v542, %v541
      %v562 = vpack.c.bf16 %v544, %v543
      %v563 = vpack.c.bf16 %v546, %v545
      %v564 = vpack.c.bf16 %v548, %v547
      %v565 = vpack.c.bf16 %v530, %v529
      %v566 = vpack.c.bf16 %v532, %v531
      %v568 = vshrl.u32 %v555, 16
      %v570 = vrot.slane %v568, 7
      %v571 = vshll.u32 %v555, 16
      %v573 = vor.u32 %v570, %v571
      %v575 = vshrl.u32 %v556, 16
      %v577 = vrot.slane %v575, 7
      %v578 = vshll.u32 %v556, 16
      %v580 = vor.u32 %v577, %v578
      %v582 = vshrl.u32 %v557, 16
      %v584 = vrot.slane %v582, 7
      %v585 = vshll.u32 %v557, 16
      %v587 = vor.u32 %v584, %v585
      %v589 = vshrl.u32 %v558, 16
      %v591 = vrot.slane %v589, 7
      %v592 = vshll.u32 %v558, 16
      %v594 = vor.u32 %v591, %v592
      %v596 = vshrl.u32 %v559, 16
      %v598 = vrot.slane %v596, 7
      %v599 = vshll.u32 %v559, 16
      %v601 = vor.u32 %v598, %v599
      %v603 = vshrl.u32 %v560, 16
      %v605 = vrot.slane %v603, 7
      %v606 = vshll.u32 %v560, 16
      %v608 = vor.u32 %v605, %v606
      %v610 = vshrl.u32 %v561, 16
      %v612 = vrot.slane %v610, 7
      %v613 = vshll.u32 %v561, 16
      %v615 = vor.u32 %v612, %v613
      %v617 = vshrl.u32 %v562, 16
      %v619 = vrot.slane %v617, 7
      %v620 = vshll.u32 %v562, 16
      %v622 = vor.u32 %v619, %v620
      %v624 = vshrl.u32 %v563, 16
      %v626 = vrot.slane %v624, 7
      %v627 = vshll.u32 %v563, 16
      %v629 = vor.u32 %v626, %v627
      %v631 = vshrl.u32 %v564, 16
      %v633 = vrot.slane %v631, 7
      %v634 = vshll.u32 %v564, 16
      %v636 = vor.u32 %v633, %v634
      %v638 = vshrl.u32 %v565, 16
      %v640 = vrot.slane %v638, 7
      %v641 = vshll.u32 %v565, 16
      %v643 = vor.u32 %v640, %v641
      %v645 = vshrl.u32 %v566, 16
      %v647 = vrot.slane %v645, 7
      %v648 = vshll.u32 %v566, 16
      %v650 = vor.u32 %v647, %v648
      %vm675 = vcmask 1040384
      %vm676 = vsmask.f32 256
      %vm677 = vmand %vm675, %vm676
      %v678 = vsel %vm677, 0, %v573
      %v679 = vsel %vm677, 0, %v580
      %v680 = vsel %vm677, 0, %v587
      %v681 = vsel %vm677, 0, %v594
      %v682 = vsel %vm677, 0, %v601
      %v683 = vsel %vm677, 0, %v608
      %v684 = vsel %vm677, 0, %v615
      %v685 = vsel %vm677, 0, %v622
      %v686 = vsel %vm677, 0, %v629
      %v687 = vsel %vm677, 0, %v636
      %v688 = vsel %vm677, 0, %v643
      %v689 = vsel %vm677, 0, %v650
      %v690 = vsel %vm677, %v570, 0
      %v691 = vsel %vm677, %v577, 0
      %v692 = vsel %vm677, %v584, 0
      %v693 = vsel %vm677, %v591, 0
      %v694 = vsel %vm677, %v598, 0
      %v695 = vsel %vm677, %v605, 0
      %v696 = vsel %vm677, %v612, 0
      %v697 = vsel %vm677, %v619, 0
      %v698 = vsel %vm677, %v626, 0
      %v699 = vsel %vm677, %v633, 0
      %v700 = vsel %vm677, %v640, 0
      %v701 = vsel %vm677, %v647, 0
      %vm702 = vsmask.f32 7424
      %v704 = vshrl.u32 %v678, 16
      %v706 = vshll.u32 %v678, 16
      %v708 = vrot.slane %v706, 1
      %v709 = vor.u32 %v704, %v708
      %v711 = vshll.u32 %v690, 16
      %v713 = vrot.slane %v711, 1
      %v714 = vsel %vm702, %v709, %v713
      %v716 = vshrl.u32 %v679, 16
      %v718 = vshll.u32 %v679, 16
      %v720 = vrot.slane %v718, 1
      %v721 = vor.u32 %v716, %v720
      %v723 = vshll.u32 %v691, 16
      %v725 = vrot.slane %v723, 1
      %v726 = vsel %vm702, %v721, %v725
      %v728 = vshrl.u32 %v680, 16
      %v730 = vshll.u32 %v680, 16
      %v732 = vrot.slane %v730, 1
      %v733 = vor.u32 %v728, %v732
      %v735 = vshll.u32 %v692, 16
      %v737 = vrot.slane %v735, 1
      %v738 = vsel %vm702, %v733, %v737
      %v740 = vshrl.u32 %v681, 16
      %v742 = vshll.u32 %v681, 16
      %v744 = vrot.slane %v742, 1
      %v745 = vor.u32 %v740, %v744
      %v747 = vshll.u32 %v693, 16
      %v749 = vrot.slane %v747, 1
      %v750 = vsel %vm702, %v745, %v749
      %v752 = vshrl.u32 %v682, 16
      %v754 = vshll.u32 %v682, 16
      %v756 = vrot.slane %v754, 1
      %v757 = vor.u32 %v752, %v756
      %v759 = vshll.u32 %v694, 16
      %v761 = vrot.slane %v759, 1
      %v762 = vsel %vm702, %v757, %v761
      %v764 = vshrl.u32 %v683, 16
      %v766 = vshll.u32 %v683, 16
      %v768 = vrot.slane %v766, 1
      %v769 = vor.u32 %v764, %v768
      %v771 = vshll.u32 %v695, 16
      %v773 = vrot.slane %v771, 1
      %v774 = vsel %vm702, %v769, %v773
      %v776 = vshrl.u32 %v684, 16
      %v778 = vshll.u32 %v684, 16
      %v780 = vrot.slane %v778, 1
      %v781 = vor.u32 %v776, %v780
      %v783 = vshll.u32 %v696, 16
      %v785 = vrot.slane %v783, 1
      %v786 = vsel %vm702, %v781, %v785
      %v788 = vshrl.u32 %v685, 16
      %v790 = vshll.u32 %v685, 16
      %v792 = vrot.slane %v790, 1
      %v793 = vor.u32 %v788, %v792
      %v795 = vshll.u32 %v697, 16
      %v797 = vrot.slane %v795, 1
      %v798 = vsel %vm702, %v793, %v797
      %v800 = vshrl.u32 %v686, 16
      %v802 = vshll.u32 %v686, 16
      %v804 = vrot.slane %v802, 1
      %v805 = vor.u32 %v800, %v804
      %v807 = vshll.u32 %v698, 16
      %v809 = vrot.slane %v807, 1
      %v810 = vsel %vm702, %v805, %v809
      %v812 = vshrl.u32 %v687, 16
      %v814 = vshll.u32 %v687, 16
      %v816 = vrot.slane %v814, 1
      %v817 = vor.u32 %v812, %v816
      %v819 = vshll.u32 %v699, 16
      %v821 = vrot.slane %v819, 1
      %v822 = vsel %vm702, %v817, %v821
      %v824 = vshrl.u32 %v688, 16
      %v826 = vshll.u32 %v688, 16
      %v828 = vrot.slane %v826, 1
      %v829 = vor.u32 %v824, %v828
      %v831 = vshll.u32 %v700, 16
      %v833 = vrot.slane %v831, 1
      %v834 = vsel %vm702, %v829, %v833
      %v836 = vshrl.u32 %v689, 16
      %v838 = vshll.u32 %v689, 16
      %v840 = vrot.slane %v838, 1
      %v841 = vor.u32 %v836, %v840
      %v843 = vshll.u32 %v701, 16
      %v845 = vrot.slane %v843, 1
      %v846 = vsel %vm702, %v841, %v845
      %847 = vrot.lane.b32.xlu0 %v714, 4
      %v848 = vpop.permute.xlu0 %847
      %849 = vrot.lane.b32.xlu0 %v726, 4
      %v850 = vpop.permute.xlu0 %849
      %851 = vrot.lane.b32.xlu0 %v738, 4
      %v852 = vpop.permute.xlu0 %851
      %853 = vrot.lane.b32.xlu0 %v750, 4
      %v854 = vpop.permute.xlu0 %853
      %855 = vrot.lane.b32.xlu0 %v762, 4
      %v856 = vpop.permute.xlu0 %855
      %857 = vrot.lane.b32.xlu0 %v774, 4
      %v858 = vpop.permute.xlu0 %857
      %859 = vrot.lane.b32.xlu0 %v786, 4
      %v860 = vpop.permute.xlu0 %859
      %861 = vrot.lane.b32.xlu0 %v798, 4
      %v862 = vpop.permute.xlu0 %861
      %863 = vrot.lane.b32.xlu0 %v810, 4
      %v864 = vpop.permute.xlu0 %863
      %865 = vrot.lane.b32.xlu0 %v822, 4
      %v866 = vpop.permute.xlu0 %865
      %867 = vrot.lane.b32.xlu0 %v834, 4
      %v868 = vpop.permute.xlu0 %867
      %869 = vrot.lane.b32.xlu0 %v846, 4
      %v870 = vpop.permute.xlu0 %869
      %vm895 = vcmask 1046528
      %v896 = vrot.slane %v678, 1
      %v897 = vrot.slane %v690, 1
      %v898 = vsel %vm895, %v896, %v897
      %v899 = vrot.slane %v679, 1
      %v900 = vrot.slane %v691, 1
      %v901 = vsel %vm895, %v899, %v900
      %v902 = vrot.slane %v680, 1
      %v903 = vrot.slane %v692, 1
      %v904 = vsel %vm895, %v902, %v903
      %v905 = vrot.slane %v681, 1
      %v906 = vrot.slane %v693, 1
      %v907 = vsel %vm895, %v905, %v906
      %v908 = vrot.slane %v682, 1
      %v909 = vrot.slane %v694, 1
      %v910 = vsel %vm895, %v908, %v909
      %v911 = vrot.slane %v683, 1
      %v912 = vrot.slane %v695, 1
      %v913 = vsel %vm895, %v911, %v912
      %v914 = vrot.slane %v684, 1
      %v915 = vrot.slane %v696, 1
      %v916 = vsel %vm895, %v914, %v915
      %v917 = vrot.slane %v685, 1
      %v918 = vrot.slane %v697, 1
      %v919 = vsel %vm895, %v917, %v918
      %v920 = vrot.slane %v686, 1
      %v921 = vrot.slane %v698, 1
      %v922 = vsel %vm895, %v920, %v921
      %v923 = vrot.slane %v687, 1
      %v924 = vrot.slane %v699, 1
      %v925 = vsel %vm895, %v923, %v924
      %v926 = vrot.slane %v688, 1
      %v927 = vrot.slane %v700, 1
      %v928 = vsel %vm895, %v926, %v927
      %v929 = vrot.slane %v689, 1
      %v930 = vrot.slane %v701, 1
      %v931 = vsel %vm895, %v929, %v930
      %932 = vrot.lane.b32.xlu0 %v898, 8
      %v933 = vpop.permute.xlu0 %932
      %934 = vrot.lane.b32.xlu0 %v901, 8
      %v935 = vpop.permute.xlu0 %934
      %936 = vrot.lane.b32.xlu0 %v904, 8
      %v937 = vpop.permute.xlu0 %936
      %938 = vrot.lane.b32.xlu0 %v907, 8
      %v939 = vpop.permute.xlu0 %938
      %940 = vrot.lane.b32.xlu0 %v910, 8
      %v941 = vpop.permute.xlu0 %940
      %942 = vrot.lane.b32.xlu0 %v913, 8
      %v943 = vpop.permute.xlu0 %942
      %944 = vrot.lane.b32.xlu0 %v916, 8
      %v945 = vpop.permute.xlu0 %944
      %946 = vrot.lane.b32.xlu0 %v919, 8
      %v947 = vpop.permute.xlu0 %946
      %948 = vrot.lane.b32.xlu0 %v922, 8
      %v949 = vpop.permute.xlu0 %948
      %950 = vrot.lane.b32.xlu0 %v925, 8
      %v951 = vpop.permute.xlu0 %950
      %952 = vrot.lane.b32.xlu0 %v928, 8
      %v953 = vpop.permute.xlu0 %952
      %954 = vrot.lane.b32.xlu0 %v931, 8
      %v955 = vpop.permute.xlu0 %954
      %vm956 = vcmask 31744
      %v958 = vsel %vm956, %v678, %v848
      %v960 = vsel %vm956, %v679, %v850
      %v962 = vsel %vm956, %v680, %v852
      %v964 = vsel %vm956, %v681, %v854
      %v966 = vsel %vm956, %v682, %v856
      %v968 = vsel %vm956, %v683, %v858
      %v970 = vsel %vm956, %v684, %v860
      %v972 = vsel %vm956, %v685, %v862
      %v974 = vsel %vm956, %v686, %v864
      %v976 = vsel %vm956, %v687, %v866
      %v978 = vsel %vm956, %v688, %v868
      %v980 = vsel %vm956, %v689, %v870
      %vm981 = vcmask 64512
      %v983 = vsel %vm981, %v958, %v933
      %v985 = vsel %vm981, %v960, %v935
      %v987 = vsel %vm981, %v962, %v937
      %v989 = vsel %vm981, %v964, %v939
      %v991 = vsel %vm981, %v966, %v941
      %v993 = vsel %vm981, %v968, %v943
      %v995 = vsel %vm981, %v970, %v945
      %v997 = vsel %vm981, %v972, %v947
      %v999 = vsel %vm981, %v974, %v949
      %v1001 = vsel %vm981, %v976, %v951
      %v1003 = vsel %vm981, %v978, %v953
      %v1005 = vsel %vm981, %v980, %v955
      %v1008 = vunpack.c.l.b16 %v550
      %v1009 = vunpack.c.l.b16 %v551
      %v1010 = vpack.c.b16 %v1009, %v1008
      %v1011 = vrot.slane %v1010, 2
      %vm1012 = vcmask 97280
      %v1013 = vsel %vm1012, %v985, 0
      %v1015 = vsel %vm1012, %v987, 0
      %v1017 = vsel %vm1012, %v989, 0
      %v1019 = vsel %vm1012, %v991, 0
      %v1021 = vsel %vm1012, %v993, 0
      %v1023 = vsel %vm1012, %v995, 0
      %v1025 = vsel %vm1012, %v997, 0
      %v1027 = vsel %vm1012, %v999, 0
      %v1029 = vsel %vm1012, %v1001, 0
      %v1031 = vsel %vm1012, %v1003, 0
      %vm1033 = vcmask 1045504
      %v1035 = vsel %vm1033, %v1011, 0
      %1037 = vmatprep.subr.bf16.mxu0 0
      %1038 = vmatpush1.bf16.msra.mxu0 %v1035
      %1039 = vmatprep.subr.bf16.mxu0 0
      %1040 = vmatpush1.bf16.msra.mxu0 0
      %1041 = vmatprep.subr.bf16.mxu0 0
      %1042 = vmatpush1.bf16.msra.mxu0 0
      %1043 = vmatprep.subr.bf16.mxu0 0
      %1044 = vmatpush1.bf16.msra.mxu0 0
      %1045 = vmatprep.subr.bf16.mxu0 0
      %1046 = vmatpush1.bf16.msra.mxu0 0
      %1047 = vmatprep.subr.bf16.mxu0 0
      %1048 = vmatpush1.bf16.msra.mxu0 0
      %1049 = vmatprep.subr.bf16.mxu0 0
      %1050 = vmatpush1.bf16.msra.mxu0 0
      %1051 = vmatprep.subr.bf16.mxu0 0
      %1052 = vmatpush1.bf16.msra.mxu0 0
      %1053 = vmatprep.subr.bf16.mxu0 0
      %1054 = vmatpush1.bf16.msra.mxu0 0
      %1055 = vmatprep.subr.bf16.mxu0 0
      %1056 = vmatpush1.bf16.msra.mxu0 0
      %1057 = vmatprep.subr.bf16.mxu0 0
      %1058 = vmatpush1.bf16.msra.mxu0 0
      %1059 = vmatprep.subr.bf16.mxu0 0
      %1060 = vmatpush1.bf16.msra.mxu0 0
      %1061 = vmatprep.subr.bf16.mxu0 0
      %1062 = vmatpush1.bf16.msra.mxu0 0
      %1063 = vmatprep.subr.bf16.mxu0 0
      %1064 = vmatpush1.bf16.msra.mxu0 0
      %1065 = vmatprep.subr.bf16.mxu0 0
      %1066 = vmatpush1.bf16.msra.mxu0 0
      %1067 = vmatprep.subr.bf16.mxu0 0
      %1068 = vmatpush1.bf16.msra.mxu0 0
      %1069 = vmatprep.mubr.bf16.mxu0 0
      %1070 = vmatmul.mubr.bf16.gmra.mrb[0].mxu0 %v1013
      %v1071 = vpop.f32.mrb[0].mxu0
      %v1072 = vadd.f32 0.0, %v1071
      %v1073 = vpop.f32.mrb[0].mxu0
      %v1074 = vpop.f32.mrb[0].mxu0
      %v1075 = vadd.f32 0.0, %v1074
      %v1076 = vpop.f32.mrb[0].mxu0
      %1077 = vmatprep.mubr.bf16.mxu0 0
      %1078 = vmatmul.mubr.bf16.gmra.mrb[0].mxu0 %v1015
      %v1079 = vpop.f32.mrb[0].mxu0
      %v1080 = vadd.f32 0.0, %v1079
      %v1081 = vpop.f32.mrb[0].mxu0
      %v1082 = vpop.f32.mrb[0].mxu0
      %v1083 = vadd.f32 0.0, %v1082
      %v1084 = vpop.f32.mrb[0].mxu0
      %1085 = vmatprep.mubr.bf16.mxu0 0
      %1086 = vmatmul.mubr.bf16.gmra.mrb[0].mxu0 %v1017
      %v1087 = vpop.f32.mrb[0].mxu0
      %v1088 = vadd.f32 0.0, %v1087
      %v1089 = vpop.f32.mrb[0].mxu0
      %v1090 = vpop.f32.mrb[0].mxu0
      %v1091 = vadd.f32 0.0, %v1090
      %v1092 = vpop.f32.mrb[0].mxu0
      %1093 = vmatprep.mubr.bf16.mxu0 0
      %1094 = vmatmul.mubr.bf16.gmra.mrb[0].mxu0 %v1019
      %v1095 = vpop.f32.mrb[0].mxu0
      %v1096 = vadd.f32 0.0, %v1095
      %v1097 = vpop.f32.mrb[0].mxu0
      %v1098 = vpop.f32.mrb[0].mxu0
      %v1099 = vadd.f32 0.0, %v1098
      %v1100 = vpop.f32.mrb[0].mxu0
      %1101 = vmatprep.mubr.bf16.mxu0 0
      %1102 = vmatmul.mubr.bf16.gmra.mrb[0].mxu0 %v1021
      %v1103 = vpop.f32.mrb[0].mxu0
      %v1104 = vadd.f32 0.0, %v1103
      %v1105 = vpop.f32.mrb[0].mxu0
      %v1106 = vpop.f32.mrb[0].mxu0
      %v1107 = vadd.f32 0.0, %v1106
      %v1108 = vpop.f32.mrb[0].mxu0
      %1109 = vmatprep.mubr.bf16.mxu0 0
      %1110 = vmatmul.mubr.bf16.gmra.mrb[0].mxu0 %v1023
      %v1111 = vpop.f32.mrb[0].mxu0
      %v1112 = vadd.f32 0.0, %v1111
      %v1113 = vpop.f32.mrb[0].mxu0
      %v1114 = vpop.f32.mrb[0].mxu0
      %v1115 = vadd.f32 0.0, %v1114
      %v1116 = vpop.f32.mrb[0].mxu0
      %1117 = vmatprep.mubr.bf16.mxu0 0
      %1118 = vmatmul.mubr.bf16.gmra.mrb[0].mxu0 %v1025
      %v1119 = vpop.f32.mrb[0].mxu0
      %v1120 = vadd.f32 0.0, %v1119
      %v1121 = vpop.f32.mrb[0].mxu0
      %v1122 = vpop.f32.mrb[0].mxu0
      %v1123 = vadd.f32 0.0, %v1122
      %v1124 = vpop.f32.mrb[0].mxu0
      %1125 = vmatprep.mubr.bf16.mxu0 0
      %1126 = vmatmul.mubr.bf16.gmra.mrb[0].mxu0 %v1027
      %v1127 = vpop.f32.mrb[0].mxu0
      %v1128 = vadd.f32 0.0, %v1127
      %v1129 = vpop.f32.mrb[0].mxu0
      %v1130 = vpop.f32.mrb[0].mxu0
      %v1131 = vadd.f32 0.0, %v1130
      %v1132 = vpop.f32.mrb[0].mxu0
      %1133 = vmatprep.mubr.bf16.mxu0 0
      %1134 = vmatmul.mubr.bf16.gmra.mrb[0].mxu0 %v1029
      %v1135 = vpop.f32.mrb[0].mxu0
      %v1136 = vadd.f32 0.0, %v1135
      %v1137 = vpop.f32.mrb[0].mxu0
      %v1138 = vpop.f32.mrb[0].mxu0
      %v1139 = vadd.f32 0.0, %v1138
      %v1140 = vpop.f32.mrb[0].mxu0
      %1141 = vmatprep.mubr.bf16.mxu0 0
      %1142 = vmatmul.mubr.bf16.gmra.mrb[0].mxu0 %v1031
      %v1143 = vpop.f32.mrb[0].mxu0
      %v1144 = vadd.f32 0.0, %v1143
      %v1145 = vpop.f32.mrb[0].mxu0
      %v1146 = vpop.f32.mrb[0].mxu0
      %v1147 = vadd.f32 0.0, %v1146
      %v1148 = vpop.f32.mrb[0].mxu0
      %1149 = vdwg.mxu0
      %v1151 = vunpack.c.l.b16 %v549
      %v1152 = vpack.c.b16 %v1008, %v1151
      %v1153 = vsel %vm1012, %v983, 0
      %v1156 = vsel %vm1033, %v1152, 0
      %1158 = vmatprep.subr.bf16.mxu0 0
      %1159 = vmatpush1.bf16.msra.mxu0 %v1156
      %1160 = vmatprep.subr.bf16.mxu0 0
      %1161 = vmatpush1.bf16.msra.mxu0 0
      %1162 = vmatprep.subr.bf16.mxu0 0
      %1163 = vmatpush1.bf16.msra.mxu0 0
      %1164 = vmatprep.subr.bf16.mxu0 0
      %1165 = vmatpush1.bf16.msra.mxu0 0
      %1166 = vmatprep.subr.bf16.mxu0 0
      %1167 = vmatpush1.bf16.msra.mxu0 0
      %1168 = vmatprep.subr.bf16.mxu0 0
      %1169 = vmatpush1.bf16.msra.mxu0 0
      %1170 = vmatprep.subr.bf16.mxu0 0
      %1171 = vmatpush1.bf16.msra.mxu0 0
      %1172 = vmatprep.subr.bf16.mxu0 0
      %1173 = vmatpush1.bf16.msra.mxu0 0
      %1174 = vmatprep.subr.bf16.mxu0 0
      %1175 = vmatpush1.bf16.msra.mxu0 0
      %1176 = vmatprep.subr.bf16.mxu0 0
      %1177 = vmatpush1.bf16.msra.mxu0 0
      %1178 = vmatprep.subr.bf16.mxu0 0
      %1179 = vmatpush1.bf16.msra.mxu0 0
      %1180 = vmatprep.subr.bf16.mxu0 0
      %1181 = vmatpush1.bf16.msra.mxu0 0
      %1182 = vmatprep.subr.bf16.mxu0 0
      %1183 = vmatpush1.bf16.msra.mxu0 0
      %1184 = vmatprep.subr.bf16.mxu0 0
      %1185 = vmatpush1.bf16.msra.mxu0 0
      %1186 = vmatprep.subr.bf16.mxu0 0
      %1187 = vmatpush1.bf16.msra.mxu0 0
      %1188 = vmatprep.subr.bf16.mxu0 0
      %1189 = vmatpush1.bf16.msra.mxu0 0
      %1190 = vmatprep.mubr.bf16.mxu0 0
      %1191 = vmatmul.mubr.bf16.gmra.mrb[0].mxu0 %v1153
      %v1192 = vpop.f32.mrb[0].mxu0
      %v1193 = vadd.f32 %v1072, %v1192
      %v1194 = vpop.f32.mrb[0].mxu0
      %v1195 = vpop.f32.mrb[0].mxu0
      %v1196 = vadd.f32 %v1075, %v1195
      %v1197 = vpop.f32.mrb[0].mxu0
      %1198 = vmatprep.mubr.bf16.mxu0 0
      %1199 = vmatmul.mubr.bf16.gmra.mrb[0].mxu0 %v1013
      %v1200 = vpop.f32.mrb[0].mxu0
      %v1201 = vadd.f32 %v1080, %v1200
      %v1202 = vpop.f32.mrb[0].mxu0
      %v1203 = vpop.f32.mrb[0].mxu0
      %v1204 = vadd.f32 %v1083, %v1203
      %v1205 = vpop.f32.mrb[0].mxu0
      %1206 = vmatprep.mubr.bf16.mxu0 0
      %1207 = vmatmul.mubr.bf16.gmra.mrb[0].mxu0 %v1015
      %v1208 = vpop.f32.mrb[0].mxu0
      %v1209 = vadd.f32 %v1088, %v1208
      %v1210 = vpop.f32.mrb[0].mxu0
      %v1211 = vpop.f32.mrb[0].mxu0
      %v1212 = vadd.f32 %v1091, %v1211
      %v1213 = vpop.f32.mrb[0].mxu0
      %1214 = vmatprep.mubr.bf16.mxu0 0
      %1215 = vmatmul.mubr.bf16.gmra.mrb[0].mxu0 %v1017
      %v1216 = vpop.f32.mrb[0].mxu0
      %v1217 = vadd.f32 %v1096, %v1216
      %v1218 = vpop.f32.mrb[0].mxu0
      %v1219 = vpop.f32.mrb[0].mxu0
      %v1220 = vadd.f32 %v1099, %v1219
      %v1221 = vpop.f32.mrb[0].mxu0
      %1222 = vmatprep.mubr.bf16.mxu0 0
      %1223 = vmatmul.mubr.bf16.gmra.mrb[0].mxu0 %v1019
      %v1224 = vpop.f32.mrb[0].mxu0
      %v1225 = vadd.f32 %v1104, %v1224
      %v1226 = vpop.f32.mrb[0].mxu0
      %v1227 = vpop.f32.mrb[0].mxu0
      %v1228 = vadd.f32 %v1107, %v1227
      %v1229 = vpop.f32.mrb[0].mxu0
      %1230 = vmatprep.mubr.bf16.mxu0 0
      %1231 = vmatmul.mubr.bf16.gmra.mrb[0].mxu0 %v1021
      %v1232 = vpop.f32.mrb[0].mxu0
      %v1233 = vadd.f32 %v1112, %v1232
      %v1234 = vpop.f32.mrb[0].mxu0
      %v1235 = vpop.f32.mrb[0].mxu0
      %v1236 = vadd.f32 %v1115, %v1235
      %v1237 = vpop.f32.mrb[0].mxu0
      %1238 = vmatprep.mubr.bf16.mxu0 0
      %1239 = vmatmul.mubr.bf16.gmra.mrb[0].mxu0 %v1023
      %v1240 = vpop.f32.mrb[0].mxu0
      %v1241 = vadd.f32 %v1120, %v1240
      %v1242 = vpop.f32.mrb[0].mxu0
      %v1243 = vpop.f32.mrb[0].mxu0
      %v1244 = vadd.f32 %v1123, %v1243
      %v1245 = vpop.f32.mrb[0].mxu0
      %1246 = vmatprep.mubr.bf16.mxu0 0
      %1247 = vmatmul.mubr.bf16.gmra.mrb[0].mxu0 %v1025
      %v1248 = vpop.f32.mrb[0].mxu0
      %v1249 = vadd.f32 %v1128, %v1248
      %v1250 = vpop.f32.mrb[0].mxu0
      %v1251 = vpop.f32.mrb[0].mxu0
      %v1252 = vadd.f32 %v1131, %v1251
      %v1253 = vpop.f32.mrb[0].mxu0
      %1254 = vmatprep.mubr.bf16.mxu0 0
      %1255 = vmatmul.mubr.bf16.gmra.mrb[0].mxu0 %v1027
      %v1256 = vpop.f32.mrb[0].mxu0
      %v1257 = vadd.f32 %v1136, %v1256
      %v1258 = vpop.f32.mrb[0].mxu0
      %v1259 = vpop.f32.mrb[0].mxu0
      %v1260 = vadd.f32 %v1139, %v1259
      %v1261 = vpop.f32.mrb[0].mxu0
      %1262 = vmatprep.mubr.bf16.mxu0 0
      %1263 = vmatmul.mubr.bf16.gmra.mrb[0].mxu0 %v1029
      %v1264 = vpop.f32.mrb[0].mxu0
      %v1265 = vadd.f32 %v1144, %v1264
      %v1266 = vpop.f32.mrb[0].mxu0
      %v1267 = vpop.f32.mrb[0].mxu0
      %v1268 = vadd.f32 %v1147, %v1267
      %v1269 = vpop.f32.mrb[0].mxu0
      %1270 = vdwg.mxu0
      %v1273 = vunpack.c.l.b16 %v552
      %v1274 = vunpack.c.l.b16 %v553
      %v1275 = vpack.c.b16 %v1274, %v1273
      %v1276 = vsel %vm1012, %v1005, 0
      %v1279 = vsel %vm1033, %v1275, 0
      %1281 = vmatprep.subr.bf16.mxu0 0
      %1282 = vmatpush1.bf16.msra.mxu0 %v1279
      %1283 = vmatprep.subr.bf16.mxu0 0
      %1284 = vmatpush1.bf16.msra.mxu0 0
      %1285 = vmatprep.subr.bf16.mxu0 0
      %1286 = vmatpush1.bf16.msra.mxu0 0
      %1287 = vmatprep.subr.bf16.mxu0 0
      %1288 = vmatpush1.bf16.msra.mxu0 0
      %1289 = vmatprep.subr.bf16.mxu0 0
      %1290 = vmatpush1.bf16.msra.mxu0 0
      %1291 = vmatprep.subr.bf16.mxu0 0
      %1292 = vmatpush1.bf16.msra.mxu0 0
      %1293 = vmatprep.subr.bf16.mxu0 0
      %1294 = vmatpush1.bf16.msra.mxu0 0
      %1295 = vmatprep.subr.bf16.mxu0 0
      %1296 = vmatpush1.bf16.msra.mxu0 0
      %1297 = vmatprep.subr.bf16.mxu0 0
      %1298 = vmatpush1.bf16.msra.mxu0 0
      %1299 = vmatprep.subr.bf16.mxu0 0
      %1300 = vmatpush1.bf16.msra.mxu0 0
      %1301 = vmatprep.subr.bf16.mxu0 0
      %1302 = vmatpush1.bf16.msra.mxu0 0
      %1303 = vmatprep.subr.bf16.mxu0 0
      %1304 = vmatpush1.bf16.msra.mxu0 0
      %1305 = vmatprep.subr.bf16.mxu0 0
      %1306 = vmatpush1.bf16.msra.mxu0 0
      %1307 = vmatprep.subr.bf16.mxu0 0
      %1308 = vmatpush1.bf16.msra.mxu0 0
      %1309 = vmatprep.subr.bf16.mxu0 0
      %1310 = vmatpush1.bf16.msra.mxu0 0
      %1311 = vmatprep.subr.bf16.mxu0 0
      %1312 = vmatpush1.bf16.msra.mxu0 0
      %1313 = vmatprep.mubr.bf16.mxu0 0
      %1314 = vmatmul.mubr.bf16.gmra.mrb[0].mxu0 %v1015
      %v1315 = vpop.f32.mrb[0].mxu0
      %v1316 = vadd.f32 0.0, %v1315
      %v1317 = vpop.f32.mrb[0].mxu0
      %v1318 = vpop.f32.mrb[0].mxu0
      %v1319 = vadd.f32 0.0, %v1318
      %v1320 = vpop.f32.mrb[0].mxu0
      %1321 = vmatprep.mubr.bf16.mxu0 0
      %1322 = vmatmul.mubr.bf16.gmra.mrb[0].mxu0 %v1017
      %v1323 = vpop.f32.mrb[0].mxu0
      %v1324 = vadd.f32 0.0, %v1323
      %v1325 = vpop.f32.mrb[0].mxu0
      %v1326 = vpop.f32.mrb[0].mxu0
      %v1327 = vadd.f32 0.0, %v1326
      %v1328 = vpop.f32.mrb[0].mxu0
      %1329 = vmatprep.mubr.bf16.mxu0 0
      %1330 = vmatmul.mubr.bf16.gmra.mrb[0].mxu0 %v1019
      %v1331 = vpop.f32.mrb[0].mxu0
      %v1332 = vadd.f32 0.0, %v1331
      %v1333 = vpop.f32.mrb[0].mxu0
      %v1334 = vpop.f32.mrb[0].mxu0
      %v1335 = vadd.f32 0.0, %v1334
      %v1336 = vpop.f32.mrb[0].mxu0
      %1337 = vmatprep.mubr.bf16.mxu0 0
      %1338 = vmatmul.mubr.bf16.gmra.mrb[0].mxu0 %v1021
      %v1339 = vpop.f32.mrb[0].mxu0
      %v1340 = vadd.f32 0.0, %v1339
      %v1341 = vpop.f32.mrb[0].mxu0
      %v1342 = vpop.f32.mrb[0].mxu0
      %v1343 = vadd.f32 0.0, %v1342
      %v1344 = vpop.f32.mrb[0].mxu0
      %1345 = vmatprep.mubr.bf16.mxu0 0
      %1346 = vmatmul.mubr.bf16.gmra.mrb[0].mxu0 %v1023
      %v1347 = vpop.f32.mrb[0].mxu0
      %v1348 = vadd.f32 0.0, %v1347
      %v1349 = vpop.f32.mrb[0].mxu0
      %v1350 = vpop.f32.mrb[0].mxu0
      %v1351 = vadd.f32 0.0, %v1350
      %v1352 = vpop.f32.mrb[0].mxu0
      %1353 = vmatprep.mubr.bf16.mxu0 0
      %1354 = vmatmul.mubr.bf16.gmra.mrb[0].mxu0 %v1025
      %v1355 = vpop.f32.mrb[0].mxu0
      %v1356 = vadd.f32 0.0, %v1355
      %v1357 = vpop.f32.mrb[0].mxu0
      %v1358 = vpop.f32.mrb[0].mxu0
      %v1359 = vadd.f32 0.0, %v1358
      %v1360 = vpop.f32.mrb[0].mxu0
      %1361 = vmatprep.mubr.bf16.mxu0 0
      %1362 = vmatmul.mubr.bf16.gmra.mrb[0].mxu0 %v1027
      %v1363 = vpop.f32.mrb[0].mxu0
      %v1364 = vadd.f32 0.0, %v1363
      %v1365 = vpop.f32.mrb[0].mxu0
      %v1366 = vpop.f32.mrb[0].mxu0
      %v1367 = vadd.f32 0.0, %v1366
      %v1368 = vpop.f32.mrb[0].mxu0
      %1369 = vmatprep.mubr.bf16.mxu0 0
      %1370 = vmatmul.mubr.bf16.gmra.mrb[0].mxu0 %v1029
      %v1371 = vpop.f32.mrb[0].mxu0
      %v1372 = vadd.f32 0.0, %v1371
      %v1373 = vpop.f32.mrb[0].mxu0
      %v1374 = vpop.f32.mrb[0].mxu0
      %v1375 = vadd.f32 0.0, %v1374
      %v1376 = vpop.f32.mrb[0].mxu0
      %1377 = vmatprep.mubr.bf16.mxu0 0
      %1378 = vmatmul.mubr.bf16.gmra.mrb[0].mxu0 %v1031
      %v1379 = vpop.f32.mrb[0].mxu0
      %v1380 = vadd.f32 0.0, %v1379
      %v1381 = vpop.f32.mrb[0].mxu0
      %v1382 = vpop.f32.mrb[0].mxu0
      %v1383 = vadd.f32 0.0, %v1382
      %v1384 = vpop.f32.mrb[0].mxu0
      %1385 = vmatprep.mubr.bf16.mxu0 0
      %1386 = vmatmul.mubr.bf16.gmra.mrb[0].mxu0 %v1276
      %v1387 = vpop.f32.mrb[0].mxu0
      %v1388 = vadd.f32 0.0, %v1387
      %v1389 = vpop.f32.mrb[0].mxu0
      %v1390 = vpop.f32.mrb[0].mxu0
      %v1391 = vadd.f32 0.0, %v1390
      %v1392 = vpop.f32.mrb[0].mxu0
      %1393 = vdwg.mxu0
      %v1394 = vadd.f32 %v1193, %v1316
      %v1395 = vadd.f32 %v1196, %v1319
      %v1396 = vadd.f32 %v1201, %v1324
      %v1397 = vadd.f32 %v1204, %v1327
      %v1398 = vadd.f32 %v1209, %v1332
      %v1399 = vadd.f32 %v1212, %v1335
      %v1400 = vadd.f32 %v1217, %v1340
      %v1401 = vadd.f32 %v1220, %v1343
      %v1402 = vadd.f32 %v1225, %v1348
      %v1403 = vadd.f32 %v1228, %v1351
      %v1404 = vadd.f32 %v1233, %v1356
      %v1405 = vadd.f32 %v1236, %v1359
      %v1406 = vadd.f32 %v1241, %v1364
      %v1407 = vadd.f32 %v1244, %v1367
      %v1408 = vadd.f32 %v1249, %v1372
      %v1409 = vadd.f32 %v1252, %v1375
      %v1410 = vadd.f32 %v1257, %v1380
      %v1411 = vadd.f32 %v1260, %v1383
      %v1412 = vadd.f32 %v1265, %v1388
      %v1413 = vadd.f32 %v1268, %v1391
      %v1415 = vlaneseq
      %v1416 = vshrl.u32 %v1415, 7
      %v1417 = vsub.s32 0, %v1416
      %v1418 = vrot.slane %v554, %v1417
      %v1420 = vadd.f32 %v1394, %v1418
      %v1421 = vadd.f32 %v1395, %v1418
      %v1422 = vadd.f32 %v1396, %v1418
      %v1423 = vadd.f32 %v1397, %v1418
      %v1424 = vadd.f32 %v1398, %v1418
      %v1425 = vadd.f32 %v1399, %v1418
      %v1426 = vadd.f32 %v1400, %v1418
      %v1427 = vadd.f32 %v1401, %v1418
      %v1428 = vadd.f32 %v1402, %v1418
      %v1429 = vadd.f32 %v1403, %v1418
      %v1430 = vadd.f32 %v1404, %v1418
      %v1431 = vadd.f32 %v1405, %v1418
      %v1432 = vadd.f32 %v1406, %v1418
      %v1433 = vadd.f32 %v1407, %v1418
      %v1434 = vadd.f32 %v1408, %v1418
      %v1435 = vadd.f32 %v1409, %v1418
      %v1436 = vadd.f32 %v1410, %v1418
      %v1437 = vadd.f32 %v1411, %v1418
      %v1438 = vadd.f32 %v1412, %v1418
      %v1439 = vadd.f32 %v1413, %v1418
      %v1440 = vmax.f32 %v1420, 0.0
      %v1441 = vmax.f32 %v1421, 0.0
      %v1442 = vmax.f32 %v1422, 0.0
      %v1443 = vmax.f32 %v1423, 0.0
      %v1444 = vmax.f32 %v1424, 0.0
      %v1445 = vmax.f32 %v1425, 0.0
      %v1446 = vmax.f32 %v1426, 0.0
      %v1447 = vmax.f32 %v1427, 0.0
      %v1448 = vmax.f32 %v1428, 0.0
      %v1449 = vmax.f32 %v1429, 0.0
      %v1450 = vmax.f32 %v1430, 0.0
      %v1451 = vmax.f32 %v1431, 0.0
      %v1452 = vmax.f32 %v1432, 0.0
      %v1453 = vmax.f32 %v1433, 0.0
      %v1454 = vmax.f32 %v1434, 0.0
      %v1455 = vmax.f32 %v1435, 0.0
      %v1456 = vmax.f32 %v1436, 0.0
      %v1457 = vmax.f32 %v1437, 0.0
      %v1458 = vmax.f32 %v1438, 0.0
      %v1459 = vmax.f32 %v1439, 0.0
      %v1460 = vsel %vm516, 1, 0
      %v1461 = vsel %vm528, 1, 0
      %vm1462 = vcmp.eq.s32.totalorder %v1460, 1
      %vm1463 = vcmp.eq.s32.totalorder %v1461, 1
      %v1464 = vsel %vm1462, %v1440, 0.0
      %v1465 = vsel %vm1462, %v1441, 0.0
      %v1466 = vsel 1, %v1442, 0.0
      %v1467 = vsel 1, %v1443, 0.0
      %v1468 = vsel 1, %v1444, 0.0
      %v1469 = vsel 1, %v1445, 0.0
      %v1470 = vsel 1, %v1446, 0.0
      %v1471 = vsel 1, %v1447, 0.0
      %v1472 = vsel 1, %v1448, 0.0
      %v1473 = vsel 1, %v1449, 0.0
      %v1474 = vsel 1, %v1450, 0.0
      %v1475 = vsel 1, %v1451, 0.0
      %v1476 = vsel 1, %v1452, 0.0
      %v1477 = vsel 1, %v1453, 0.0
      %v1478 = vsel 1, %v1454, 0.0
      %v1479 = vsel 1, %v1455, 0.0
      %v1480 = vsel 1, %v1456, 0.0
      %v1481 = vsel 1, %v1457, 0.0
      %v1482 = vsel %vm1463, %v1458, 0.0
      %v1483 = vsel %vm1463, %v1459, 0.0
      %v1484 = vld [vmem:[%s5] sm:$0xf]
      %v1485 = vld [vmem:[%s5 + $0x4] sm:$0xf]
      %v1486 = vld [vmem:[%s5 + $0x8] sm:$0xf]
      %v1487 = vld [vmem:[%s5 + $0xc] sm:$0xf]
      %v1488 = vld [vmem:[%s5 + $0x10] sm:$0xf]
      %v1489 = vld [vmem:[%s5 + $0x14] sm:$0xf]
      %v1490 = vld [vmem:[%s5 + $0x18] sm:$0xf]
      %v1491 = vld [vmem:[%s5 + $0x1c] sm:$0xf]
      %v1492 = vld [vmem:[%s5 + $0x20] sm:$0xf]
      %v1493 = vld [vmem:[%s5 + $0x24] sm:$0xf]
      %v1494 = vld [vmem:[%s5 + $0x28] sm:$0xf]
      %v1495 = vld [vmem:[%s5 + $0x2c] sm:$0xf]
      %v1496 = vld [vmem:[%s5 + $0x30] sm:$0xf]
      %v1497 = vld [vmem:[%s5 + $0x34] sm:$0xf]
      %v1498 = vld [vmem:[%s5 + $0x38] sm:$0xf]
      %v1499 = vld [vmem:[%s5 + $0x3c] sm:$0xf]
      %v1500 = vld [vmem:[%s5 + $0x40] sm:$0xf]
      %v1501 = vld [vmem:[%s5 + $0x44] sm:$0xf]
      %v1502 = vld [vmem:[%s5 + $0x48] sm:$0xf]
      %v1503 = vld [vmem:[%s5 + $0x4c] sm:$0xf]
      %v1504 = vld [vmem:[%s5 + $0x50] sm:$0xf]
      %v1505 = vld [vmem:[%s5 + $0x54] sm:$0xf]
      %v1506 = vld [vmem:[%s5 + $0x58] sm:$0xf]
      %v1507 = vld [vmem:[%s5 + $0x5c] sm:$0xf]
      %v1508 = vld [vmem:[%s5 + $0x60] sm:$0xf]
      %v1509 = vld [vmem:[%s5 + $0x64] sm:$0xf]
      %v1510 = vld [vmem:[%s5 + $0x68] sm:$0xf]
      %v1511 = vld [vmem:[%s5 + $0x6c] sm:$0xf]
      %v1512 = vld [vmem:[%s5 + $0x70] sm:$0xf]
      %v1513 = vld [vmem:[%s5 + $0x74] sm:$0xf]
      %v1514 = vld [vmem:[%s5 + $0x78] sm:$0xf]
      %v1515 = vld [vmem:[%s5 + $0x7c] sm:$0xf]
      %v1516 = vld [vmem:[%s5 + $0x80] sm:$0xf]
      %v1517 = vld [vmem:[%s5 + $0x84] sm:$0xf]
      %v1518 = vld [vmem:[%s5 + $0x88] sm:$0xf]
      %v1519 = vld [vmem:[%s5 + $0x8c] sm:$0xf]
      %v1520 = vld [vmem:[%s5 + $0x90] sm:$0xf]
      %v1521 = vld [vmem:[%s5 + $0x94] sm:$0xf]
      %v1522 = vld [vmem:[%s5 + $0x98] sm:$0xf]
      %v1523 = vld [vmem:[%s5 + $0x9c] sm:$0xf]
      %v1524 = vld [vmem:[%s5 + $0xa0] sm:$0xf]
      %v1525 = vld [vmem:[%s5 + $0xa4] sm:$0xf]
      %v1526 = vld [vmem:[%s5 + $0xa8] sm:$0xf]
      %v1527 = vld [vmem:[%s5 + $0xac] sm:$0xf]
      %v1528 = vld [vmem:[%s5 + $0xb0] sm:$0xf]
      %v1529 = vld [vmem:[%s5 + $0xb4] sm:$0xf]
      %v1530 = vld [vmem:[%s5 + $0xb8] sm:$0xf]
      %v1531 = vld [vmem:[%s5 + $0xbc] sm:$0xf]
      %v1532 = vld [vmem:[%s5 + $0xc0] sm:$0xf]
      %v1533 = vld [vmem:[%s5 + $0xc4] sm:$0xf]
      %v1534 = vld [vmem:[%s5 + $0xc8] sm:$0xf]
      %v1535 = vld [vmem:[%s5 + $0xcc] sm:$0xf]
      %v1536 = vld [vmem:[%s5 + $0xd0] sm:$0xf]
      %v1537 = vld [vmem:[%s5 + $0xd4] sm:$0xf]
      %v1538 = vld [vmem:[%s5 + $0xd8] sm:$0xf]
      %v1539 = vld [vmem:[%s5 + $0xdc] sm:$0xf]
      %v1540 = vld [vmem:[%s5 + $0xe0] sm:$0xf]
      %v1541 = vld [vmem:[%s5 + $0xe4] sm:$0xf]
      %v1542 = vld [vmem:[%s5 + $0xe8] sm:$0xf]
      %v1543 = vld [vmem:[%s5 + $0xec] sm:$0xf]
      %v1544 = vld [vmem:[%s5 + $0xf0] sm:$0xf]
      %v1545 = vld [vmem:[%s5 + $0xf4] sm:$0xf]
      %v1546 = vld [vmem:[%s5 + $0xf8] sm:$0xf]
      %v1547 = vld [vmem:[%s5 + $0xfc] sm:$0xf]
      %v1548 = vld [vmem:[%s5 + $0x100] sm:$0xf]
      %v1549 = vld [vmem:[%s5 + $0x104] sm:$0xf]
      %v1550 = vld [vmem:[%s5 + $0x108] sm:$0xf]
      %v1551 = vld [vmem:[%s5 + $0x10c] sm:$0xf]
      %v1552 = vld [vmem:[%s5 + $0x110] sm:$0xf]
      %v1553 = vld [vmem:[%s5 + $0x114] sm:$0xf]
      %v1554 = vld [vmem:[%s5 + $0x118] sm:$0xf]
      %v1555 = vld [vmem:[%s5 + $0x11c] sm:$0xf]
      %v1556 = vld [vmem:[%s5 + $0x120] sm:$0xf]
      %v1557 = vld [vmem:[%s5 + $0x124] sm:$0xf]
      %v1558 = vld [vmem:[%s5 + $0x128] sm:$0xf]
      %v1559 = vld [vmem:[%s5 + $0x12c] sm:$0xf]
      %v1560 = vld [vmem:[%s5 + $0x130] sm:$0xf]
      %v1561 = vld [vmem:[%s5 + $0x134] sm:$0xf]
      %v1562 = vld [vmem:[%s5 + $0x138] sm:$0xf]
      %v1563 = vld [vmem:[%s5 + $0x13c] sm:$0xf]
      %v1564 = vld [vmem:[%s5 + $0x140] sm:$0xf]
      %v1565 = vld [vmem:[%s5 + $0x144] sm:$0xf]
      %v1566 = vld [vmem:[%s5 + $0x148] sm:$0xf]
      %v1567 = vld [vmem:[%s5 + $0x14c] sm:$0xf]
      %v1568 = vld [vmem:[%s5 + $0x150] sm:$0xf]
      %v1569 = vld [vmem:[%s5 + $0x154] sm:$0xf]
      %v1570 = vld [vmem:[%s5 + $0x158] sm:$0xf]
      %v1571 = vld [vmem:[%s5 + $0x15c] sm:$0xf]
      %v1572 = vld [vmem:[%s5 + $0x160] sm:$0xf]
      %v1573 = vld [vmem:[%s5 + $0x164] sm:$0xf]
      %v1574 = vld [vmem:[%s5 + $0x168] sm:$0xf]
      %v1575 = vld [vmem:[%s5 + $0x16c] sm:$0xf]
      %v1576 = vld [vmem:[%s5 + $0x170] sm:$0xf]
      %v1577 = vld [vmem:[%s5 + $0x174] sm:$0xf]
      %v1578 = vld [vmem:[%s5 + $0x178] sm:$0xf]
      %v1579 = vld [vmem:[%s5 + $0x17c] sm:$0xf]
      %v1580 = vld [vmem:[%s5 + $0x180] sm:$0xf]
      %v1581 = vld [vmem:[%s5 + $0x184] sm:$0xf]
      %v1582 = vld [vmem:[%s5 + $0x188] sm:$0xf]
      %v1583 = vld [vmem:[%s5 + $0x18c] sm:$0xf]
      %v1584 = vld [vmem:[%s5 + $0x190] sm:$0xf]
      %v1585 = vld [vmem:[%s5 + $0x194] sm:$0xf]
      %v1586 = vld [vmem:[%s5 + $0x198] sm:$0xf]
      %v1587 = vld [vmem:[%s5 + $0x19c] sm:$0xf]
      %v1588 = vld [vmem:[%s5 + $0x1a0] sm:$0xf]
      %v1589 = vld [vmem:[%s5 + $0x1a4] sm:$0xf]
      %v1590 = vld [vmem:[%s5 + $0x1a8] sm:$0xf]
      %v1591 = vld [vmem:[%s5 + $0x1ac] sm:$0xf]
      %v1592 = vld [vmem:[%s5 + $0x1b0] sm:$0xf]
      %v1593 = vld [vmem:[%s5 + $0x1b4] sm:$0xf]
      %v1594 = vld [vmem:[%s5 + $0x1b8] sm:$0xf]
      %v1595 = vld [vmem:[%s5 + $0x1bc] sm:$0xf]
      %v1596 = vld [vmem:[%s5 + $0x1c0] sm:$0xf]
      %v1597 = vld [vmem:[%s5 + $0x1c4] sm:$0xf]
      %v1598 = vld [vmem:[%s5 + $0x1c8] sm:$0xf]
      %v1599 = vld [vmem:[%s5 + $0x1cc] sm:$0xf]
      %v1600 = vld [vmem:[%s5 + $0x1d0] sm:$0xf]
      %v1601 = vld [vmem:[%s5 + $0x1d4] sm:$0xf]
      %v1602 = vld [vmem:[%s5 + $0x1d8] sm:$0xf]
      %v1603 = vld [vmem:[%s5 + $0x1dc] sm:$0xf]
      %v1604 = vld [vmem:[%s5 + $0x1e0] sm:$0xf]
      %v1605 = vld [vmem:[%s5 + $0x1e4] sm:$0xf]
      %v1606 = vld [vmem:[%s5 + $0x1e8] sm:$0xf]
      %v1607 = vld [vmem:[%s5 + $0x1ec] sm:$0xf]
      %v1608 = vld [vmem:[%s5 + $0x1f0] sm:$0xf]
      %v1609 = vld [vmem:[%s5 + $0x1f4] sm:$0xf]
      %v1610 = vld [vmem:[%s5 + $0x1f8] sm:$0xf]
      %v1611 = vld [vmem:[%s5 + $0x1fc] sm:$0xf]
      %v1612 = vld [vmem:[%s5 + $0x200] sm:$0xf]
      %v1613 = vld [vmem:[%s5 + $0x204] sm:$0xf]
      %v1614 = vld [vmem:[%s5 + $0x208] sm:$0xf]
      %v1615 = vld [vmem:[%s5 + $0x20c] sm:$0xf]
      %v1616 = vld [vmem:[%s5 + $0x210] sm:$0xf]
      %v1617 = vld [vmem:[%s5 + $0x214] sm:$0xf]
      %v1618 = vld [vmem:[%s5 + $0x218] sm:$0xf]
      %v1619 = vld [vmem:[%s5 + $0x21c] sm:$0xf]
      %v1620 = vld [vmem:[%s5 + $0x220] sm:$0xf]
      %v1621 = vld [vmem:[%s5 + $0x224] sm:$0xf]
      %v1622 = vld [vmem:[%s5 + $0x228] sm:$0xf]
      %v1623 = vld [vmem:[%s5 + $0x22c] sm:$0xf]
      %v1624 = vld [vmem:[%s5 + $0x230] sm:$0xf]
      %v1625 = vld [vmem:[%s5 + $0x234] sm:$0xf]
      %v1626 = vld [vmem:[%s5 + $0x238] sm:$0xf]
      %v1627 = vld [vmem:[%s5 + $0x23c] sm:$0xf]
      %v1628 = vld [vmem:[%s6] sm:$0x1]
      %v1629 = vpack.c.bf16 %v1465, %v1464
      %v1630 = vpack.c.bf16 %v1467, %v1466
      %v1631 = vpack.c.bf16 %v1469, %v1468
      %v1632 = vpack.c.bf16 %v1471, %v1470
      %v1633 = vpack.c.bf16 %v1473, %v1472
      %v1634 = vpack.c.bf16 %v1475, %v1474
      %v1635 = vpack.c.bf16 %v1477, %v1476
      %v1636 = vpack.c.bf16 %v1479, %v1478
      %v1637 = vpack.c.bf16 %v1481, %v1480
      %v1638 = vpack.c.bf16 %v1483, %v1482
      %v1640 = vshrl.u32 %v1629, 16
      %v1642 = vrot.slane %v1640, 7
      %v1643 = vshll.u32 %v1629, 16
      %v1645 = vor.u32 %v1642, %v1643
      %v1647 = vshrl.u32 %v1630, 16
      %v1649 = vrot.slane %v1647, 7
      %v1650 = vshll.u32 %v1630, 16
      %v1652 = vor.u32 %v1649, %v1650
      %v1654 = vshrl.u32 %v1631, 16
      %v1656 = vrot.slane %v1654, 7
      %v1657 = vshll.u32 %v1631, 16
      %v1659 = vor.u32 %v1656, %v1657
      %v1661 = vshrl.u32 %v1632, 16
      %v1663 = vrot.slane %v1661, 7
      %v1664 = vshll.u32 %v1632, 16
      %v1666 = vor.u32 %v1663, %v1664
      %v1668 = vshrl.u32 %v1633, 16
      %v1670 = vrot.slane %v1668, 7
      %v1671 = vshll.u32 %v1633, 16
      %v1673 = vor.u32 %v1670, %v1671
      %v1675 = vshrl.u32 %v1634, 16
      %v1677 = vrot.slane %v1675, 7
      %v1678 = vshll.u32 %v1634, 16
      %v1680 = vor.u32 %v1677, %v1678
      %v1682 = vshrl.u32 %v1635, 16
      %v1684 = vrot.slane %v1682, 7
      %v1685 = vshll.u32 %v1635, 16
      %v1687 = vor.u32 %v1684, %v1685
      %v1689 = vshrl.u32 %v1636, 16
      %v1691 = vrot.slane %v1689, 7
      %v1692 = vshll.u32 %v1636, 16
      %v1694 = vor.u32 %v1691, %v1692
      %v1696 = vshrl.u32 %v1637, 16
      %v1698 = vrot.slane %v1696, 7
      %v1699 = vshll.u32 %v1637, 16
      %v1701 = vor.u32 %v1698, %v1699
      %v1703 = vshrl.u32 %v1638, 16
      %v1705 = vrot.slane %v1703, 7
      %v1706 = vshll.u32 %v1638, 16
      %v1708 = vor.u32 %v1705, %v1706
      %v1729 = vsel %vm677, 0, %v1645
      %v1730 = vsel %vm677, 0, %v1652
      %v1731 = vsel %vm677, 0, %v1659
      %v1732 = vsel %vm677, 0, %v1666
      %v1733 = vsel %vm677, 0, %v1673
      %v1734 = vsel %vm677, 0, %v1680
      %v1735 = vsel %vm677, 0, %v1687
      %v1736 = vsel %vm677, 0, %v1694
      %v1737 = vsel %vm677, 0, %v1701
      %v1738 = vsel %vm677, 0, %v1708
      %v1739 = vsel %vm677, %v1642, 0
      %v1740 = vsel %vm677, %v1649, 0
      %v1741 = vsel %vm677, %v1656, 0
      %v1742 = vsel %vm677, %v1663, 0
      %v1743 = vsel %vm677, %v1670, 0
      %v1744 = vsel %vm677, %v1677, 0
      %v1745 = vsel %vm677, %v1684, 0
      %v1746 = vsel %vm677, %v1691, 0
      %v1747 = vsel %vm677, %v1698, 0
      %v1748 = vsel %vm677, %v1705, 0
      %v1750 = vshrl.u32 %v1729, 16
      %v1752 = vshll.u32 %v1729, 16
      %v1754 = vrot.slane %v1752, 1
      %v1755 = vor.u32 %v1750, %v1754
      %v1757 = vshll.u32 %v1739, 16
      %v1759 = vrot.slane %v1757, 1
      %v1760 = vsel %vm702, %v1755, %v1759
      %v1762 = vshrl.u32 %v1730, 16
      %v1764 = vshll.u32 %v1730, 16
      %v1766 = vrot.slane %v1764, 1
      %v1767 = vor.u32 %v1762, %v1766
      %v1769 = vshll.u32 %v1740, 16
      %v1771 = vrot.slane %v1769, 1
      %v1772 = vsel %vm702, %v1767, %v1771
      %v1774 = vshrl.u32 %v1731, 16
      %v1776 = vshll.u32 %v1731, 16
      %v1778 = vrot.slane %v1776, 1
      %v1779 = vor.u32 %v1774, %v1778
      %v1781 = vshll.u32 %v1741, 16
      %v1783 = vrot.slane %v1781, 1
      %v1784 = vsel %vm702, %v1779, %v1783
      %v1786 = vshrl.u32 %v1732, 16
      %v1788 = vshll.u32 %v1732, 16
      %v1790 = vrot.slane %v1788, 1
      %v1791 = vor.u32 %v1786, %v1790
      %v1793 = vshll.u32 %v1742, 16
      %v1795 = vrot.slane %v1793, 1
      %v1796 = vsel %vm702, %v1791, %v1795
      %v1798 = vshrl.u32 %v1733, 16
      %v1800 = vshll.u32 %v1733, 16
      %v1802 = vrot.slane %v1800, 1
      %v1803 = vor.u32 %v1798, %v1802
      %v1805 = vshll.u32 %v1743, 16
      %v1807 = vrot.slane %v1805, 1
      %v1808 = vsel %vm702, %v1803, %v1807
      %v1810 = vshrl.u32 %v1734, 16
      %v1812 = vshll.u32 %v1734, 16
      %v1814 = vrot.slane %v1812, 1
      %v1815 = vor.u32 %v1810, %v1814
      %v1817 = vshll.u32 %v1744, 16
      %v1819 = vrot.slane %v1817, 1
      %v1820 = vsel %vm702, %v1815, %v1819
      %v1822 = vshrl.u32 %v1735, 16
      %v1824 = vshll.u32 %v1735, 16
      %v1826 = vrot.slane %v1824, 1
      %v1827 = vor.u32 %v1822, %v1826
      %v1829 = vshll.u32 %v1745, 16
      %v1831 = vrot.slane %v1829, 1
      %v1832 = vsel %vm702, %v1827, %v1831
      %v1834 = vshrl.u32 %v1736, 16
      %v1836 = vshll.u32 %v1736, 16
      %v1838 = vrot.slane %v1836, 1
      %v1839 = vor.u32 %v1834, %v1838
      %v1841 = vshll.u32 %v1746, 16
      %v1843 = vrot.slane %v1841, 1
      %v1844 = vsel %vm702, %v1839, %v1843
      %v1846 = vshrl.u32 %v1737, 16
      %v1848 = vshll.u32 %v1737, 16
      %v1850 = vrot.slane %v1848, 1
      %v1851 = vor.u32 %v1846, %v1850
      %v1853 = vshll.u32 %v1747, 16
      %v1855 = vrot.slane %v1853, 1
      %v1856 = vsel %vm702, %v1851, %v1855
      %v1858 = vshrl.u32 %v1738, 16
      %v1860 = vshll.u32 %v1738, 16
      %v1862 = vrot.slane %v1860, 1
      %v1863 = vor.u32 %v1858, %v1862
      %v1865 = vshll.u32 %v1748, 16
      %v1867 = vrot.slane %v1865, 1
      %v1868 = vsel %vm702, %v1863, %v1867
      %v1899 = vrot.slane %v1729, 1
      %v1900 = vrot.slane %v1739, 1
      %v1901 = vsel %vm895, %v1899, %v1900
      %v1902 = vrot.slane %v1730, 1
      %v1903 = vrot.slane %v1740, 1
      %v1904 = vsel %vm895, %v1902, %v1903
      %v1905 = vrot.slane %v1731, 1
      %v1906 = vrot.slane %v1741, 1
      %v1907 = vsel %vm895, %v1905, %v1906
      %v1908 = vrot.slane %v1732, 1
      %v1909 = vrot.slane %v1742, 1
      %v1910 = vsel %vm895, %v1908, %v1909
      %v1911 = vrot.slane %v1733, 1
      %v1912 = vrot.slane %v1743, 1
      %v1913 = vsel %vm895, %v1911, %v1912
      %v1914 = vrot.slane %v1734, 1
      %v1915 = vrot.slane %v1744, 1
      %v1916 = vsel %vm895, %v1914, %v1915
      %v1917 = vrot.slane %v1735, 1
      %v1918 = vrot.slane %v1745, 1
      %v1919 = vsel %vm895, %v1917, %v1918
      %v1920 = vrot.slane %v1736, 1
      %v1921 = vrot.slane %v1746, 1
      %v1922 = vsel %vm895, %v1920, %v1921
      %v1923 = vrot.slane %v1737, 1
      %v1924 = vrot.slane %v1747, 1
      %v1925 = vsel %vm895, %v1923, %v1924
      %v1926 = vrot.slane %v1738, 1
      %v1927 = vrot.slane %v1748, 1
      %v1928 = vsel %vm895, %v1926, %v1927
      %v1987 = vunpack.c.l.b16 %v1532
      %v1988 = vunpack.c.l.b16 %v1533
      %v1989 = vunpack.c.l.b16 %v1534
      %v1990 = vunpack.c.l.b16 %v1535
      %v1991 = vunpack.c.l.b16 %v1536
      %v1992 = vunpack.c.l.b16 %v1537
      %v1993 = vunpack.c.l.b16 %v1538
      %v1994 = vunpack.c.l.b16 %v1539
      %v1995 = vunpack.c.l.b16 %v1540
      %v1996 = vunpack.c.l.b16 %v1541
      %v1997 = vunpack.c.l.b16 %v1542
      %v1998 = vunpack.c.l.b16 %v1543
      %v1999 = vunpack.c.l.b16 %v1544
      %v2000 = vunpack.c.l.b16 %v1545
      %v2001 = vunpack.c.l.b16 %v1546
      %v2002 = vunpack.c.l.b16 %v1547
      %v2003 = vunpack.c.l.b16 %v1548
      %v2004 = vunpack.c.l.b16 %v1549
      %v2005 = vunpack.c.l.b16 %v1550
      %v2006 = vunpack.c.l.b16 %v1551
      %v2007 = vunpack.c.l.b16 %v1552
      %v2008 = vunpack.c.l.b16 %v1553
      %v2009 = vunpack.c.l.b16 %v1554
      %v2010 = vunpack.c.l.b16 %v1555
      %v2011 = vunpack.c.l.b16 %v1556
      %v2012 = vunpack.c.l.b16 %v1557
      %v2013 = vunpack.c.l.b16 %v1558
      %v2014 = vunpack.c.l.b16 %v1559
      %v2015 = vunpack.c.l.b16 %v1560
      %v2016 = vunpack.c.l.b16 %v1561
      %v2017 = vunpack.c.l.b16 %v1562
      %v2018 = vunpack.c.l.b16 %v1563
      %v2019 = vunpack.c.l.b16 %v1564
      %v2020 = vunpack.c.l.b16 %v1565
      %v2021 = vunpack.c.l.b16 %v1566
      %v2022 = vunpack.c.l.b16 %v1567
      %v2023 = vunpack.c.l.b16 %v1568
      %v2024 = vunpack.c.l.b16 %v1569
      %v2025 = vunpack.c.l.b16 %v1570
      %v2026 = vunpack.c.l.b16 %v1571
      %v2027 = vunpack.c.l.b16 %v1572
      %v2028 = vunpack.c.l.b16 %v1573
      %v2029 = vunpack.c.l.b16 %v1574
      %v2030 = vunpack.c.l.b16 %v1575
      %v2031 = vunpack.c.l.b16 %v1576
      %v2032 = vunpack.c.l.b16 %v1577
      %v2033 = vunpack.c.l.b16 %v1578
      %v2034 = vunpack.c.l.b16 %v1579
      %v2035 = vpack.c.b16 %v1988, %v1987
      %v2036 = vpack.c.b16 %v1990, %v1989
      %v2037 = vpack.c.b16 %v1992, %v1991
      %v2038 = vpack.c.b16 %v1994, %v1993
      %v2039 = vpack.c.b16 %v1996, %v1995
      %v2040 = vpack.c.b16 %v1998, %v1997
      %v2041 = vpack.c.b16 %v2000, %v1999
      %v2042 = vpack.c.b16 %v2002, %v2001
      %v2043 = vpack.c.b16 %v2004, %v2003
      %v2044 = vpack.c.b16 %v2006, %v2005
      %v2045 = vpack.c.b16 %v2008, %v2007
      %v2046 = vpack.c.b16 %v2010, %v2009
      %v2047 = vpack.c.b16 %v2012, %v2011
      %v2048 = vpack.c.b16 %v2014, %v2013
      %v2049 = vpack.c.b16 %v2016, %v2015
      %v2050 = vpack.c.b16 %v2018, %v2017
      %v2051 = vpack.c.b16 %v2020, %v2019
      %v2052 = vpack.c.b16 %v2022, %v2021
      %v2053 = vpack.c.b16 %v2024, %v2023
      %v2054 = vpack.c.b16 %v2026, %v2025
      %v2055 = vpack.c.b16 %v2028, %v2027
      %v2056 = vpack.c.b16 %v2030, %v2029
      %v2057 = vpack.c.b16 %v2032, %v2031
      %v2058 = vpack.c.b16 %v2034, %v2033
      %2083 = vmatprep.subr.bf16.mxu0 0
      %2084 = vmatpush1.bf16.msra.mxu0 %v2035
      %2085 = vmatprep.subr.bf16.mxu0 0
      %2086 = vmatpush1.bf16.msra.mxu0 %v2036
      %2087 = vmatprep.subr.bf16.mxu0 0
      %2088 = vmatpush1.bf16.msra.mxu0 %v2037
      %2089 = vmatprep.subr.bf16.mxu0 0
      %2090 = vmatpush1.bf16.msra.mxu0 %v2038
      %2091 = vmatprep.subr.bf16.mxu0 0
      %2092 = vmatpush1.bf16.msra.mxu0 %v2039
      %2093 = vmatprep.subr.bf16.mxu0 0
      %2094 = vmatpush1.bf16.msra.mxu0 %v2040
      %2095 = vmatprep.subr.bf16.mxu0 0
      %2096 = vmatpush1.bf16.msra.mxu0 %v2041
      %2097 = vmatprep.subr.bf16.mxu0 0
      %2098 = vmatpush1.bf16.msra.mxu0 %v2042
      %2099 = vmatprep.subr.bf16.mxu0 0
      %2100 = vmatpush1.bf16.msra.mxu0 %v2043
      %2101 = vmatprep.subr.bf16.mxu0 0
      %2102 = vmatpush1.bf16.msra.mxu0 %v2044
      %2103 = vmatprep.subr.bf16.mxu0 0
      %2104 = vmatpush1.bf16.msra.mxu0 %v2045
      %2105 = vmatprep.subr.bf16.mxu0 0
      %2106 = vmatpush1.bf16.msra.mxu0 %v2046
      %2107 = vmatprep.subr.bf16.mxu0 0
      %2108 = vmatpush1.bf16.msra.mxu0 %v2047
      %2109 = vmatprep.subr.bf16.mxu0 0
      %2110 = vmatpush1.bf16.msra.mxu0 %v2048
      %2111 = vmatprep.subr.bf16.mxu0 0
      %2112 = vmatpush1.bf16.msra.mxu0 %v2049
      %2113 = vmatprep.subr.bf16.mxu0 0
      %2114 = vmatpush1.bf16.msra.mxu0 %v2050
      %2115 = vmatprep.mubr.bf16.mxu0 %v1772
      %2116 = vmatmul.mubr.bf16.gmra.mrb[0].mxu0 %v1730
      %v2117 = vpop.f32.mrb[0].mxu0
      %v2118 = vadd.f32 0.0, %v2117
      %v2119 = vpop.f32.mrb[0].mxu0
      %v2120 = vpop.f32.mrb[0].mxu0
      %v2121 = vadd.f32 0.0, %v2120
      %v2122 = vpop.f32.mrb[0].mxu0
      %2123 = vmatprep.mubr.bf16.mxu0 %v1784
      %2124 = vmatmul.mubr.bf16.gmra.mrb[0].mxu0 %v1731
      %v2125 = vpop.f32.mrb[0].mxu0
      %v2126 = vadd.f32 0.0, %v2125
      %v2127 = vpop.f32.mrb[0].mxu0
      %v2128 = vpop.f32.mrb[0].mxu0
      %v2129 = vadd.f32 0.0, %v2128
      %v2130 = vpop.f32.mrb[0].mxu0
      %2131 = vmatprep.mubr.bf16.mxu0 %v1796
      %2132 = vmatmul.mubr.bf16.gmra.mrb[0].mxu0 %v1732
      %v2133 = vpop.f32.mrb[0].mxu0
      %v2134 = vadd.f32 0.0, %v2133
      %v2135 = vpop.f32.mrb[0].mxu0
      %v2136 = vpop.f32.mrb[0].mxu0
      %v2137 = vadd.f32 0.0, %v2136
      %v2138 = vpop.f32.mrb[0].mxu0
      %2139 = vmatprep.mubr.bf16.mxu0 %v1808
      %2140 = vmatmul.mubr.bf16.gmra.mrb[0].mxu0 %v1733
      %v2141 = vpop.f32.mrb[0].mxu0
      %v2142 = vadd.f32 0.0, %v2141
      %v2143 = vpop.f32.mrb[0].mxu0
      %v2144 = vpop.f32.mrb[0].mxu0
      %v2145 = vadd.f32 0.0, %v2144
      %v2146 = vpop.f32.mrb[0].mxu0
      %2147 = vmatprep.mubr.bf16.mxu0 %v1820
      %2148 = vmatmul.mubr.bf16.gmra.mrb[0].mxu0 %v1734
      %v2149 = vpop.f32.mrb[0].mxu0
      %v2150 = vadd.f32 0.0, %v2149
      %v2151 = vpop.f32.mrb[0].mxu0
      %v2152 = vpop.f32.mrb[0].mxu0
      %v2153 = vadd.f32 0.0, %v2152
      %v2154 = vpop.f32.mrb[0].mxu0
      %2155 = vmatprep.mubr.bf16.mxu0 %v1832
      %2156 = vmatmul.mubr.bf16.gmra.mrb[0].mxu0 %v1735
      %v2157 = vpop.f32.mrb[0].mxu0
      %v2158 = vadd.f32 0.0, %v2157
      %v2159 = vpop.f32.mrb[0].mxu0
      %v2160 = vpop.f32.mrb[0].mxu0
      %v2161 = vadd.f32 0.0, %v2160
      %v2162 = vpop.f32.mrb[0].mxu0
      %2163 = vmatprep.mubr.bf16.mxu0 %v1844
      %2164 = vmatmul.mubr.bf16.gmra.mrb[0].mxu0 %v1736
      %v2165 = vpop.f32.mrb[0].mxu0
      %v2166 = vadd.f32 0.0, %v2165
      %v2167 = vpop.f32.mrb[0].mxu0
      %v2168 = vpop.f32.mrb[0].mxu0
      %v2169 = vadd.f32 0.0, %v2168
      %v2170 = vpop.f32.mrb[0].mxu0
      %2171 = vmatprep.mubr.bf16.mxu0 %v1856
      %2172 = vmatmul.mubr.bf16.gmra.mrb[0].mxu0 %v1737
      %v2173 = vpop.f32.mrb[0].mxu0
      %v2174 = vadd.f32 0.0, %v2173
      %v2175 = vpop.f32.mrb[0].mxu0
      %v2176 = vpop.f32.mrb[0].mxu0
      %v2177 = vadd.f32 0.0, %v2176
      %v2178 = vpop.f32.mrb[0].mxu0
      %2179 = vdwg.mxu0
      %2180 = vmatprep.subr.bf16.mxu0 0
      %2181 = vmatpush1.bf16.msra.mxu0 %v2051
      %2182 = vmatprep.subr.bf16.mxu0 0
      %2183 = vmatpush1.bf16.msra.mxu0 %v2052
      %2184 = vmatprep.subr.bf16.mxu0 0
      %2185 = vmatpush1.bf16.msra.mxu0 %v2053
      %2186 = vmatprep.subr.bf16.mxu0 0
      %2187 = vmatpush1.bf16.msra.mxu0 %v2054
      %2188 = vmatprep.subr.bf16.mxu0 0
      %2189 = vmatpush1.bf16.msra.mxu0 %v2055
      %2190 = vmatprep.subr.bf16.mxu0 0
      %2191 = vmatpush1.bf16.msra.mxu0 %v2056
      %2192 = vmatprep.subr.bf16.mxu0 0
      %2193 = vmatpush1.bf16.msra.mxu0 %v2057
      %2194 = vmatprep.subr.bf16.mxu0 0
      %2195 = vmatpush1.bf16.msra.mxu0 %v2058
      %2196 = vmatprep.subr.bf16.mxu0 0
      %2197 = vmatpush1.bf16.msra.mxu0 0
      %2198 = vmatprep.subr.bf16.mxu0 0
      %2199 = vmatpush1.bf16.msra.mxu0 0
      %2200 = vmatprep.subr.bf16.mxu0 0
      %2201 = vmatpush1.bf16.msra.mxu0 0
      %2202 = vmatprep.subr.bf16.mxu0 0
      %2203 = vmatpush1.bf16.msra.mxu0 0
      %2204 = vmatprep.subr.bf16.mxu0 0
      %2205 = vmatpush1.bf16.msra.mxu0 0
      %2206 = vmatprep.subr.bf16.mxu0 0
      %2207 = vmatpush1.bf16.msra.mxu0 0
      %2208 = vmatprep.subr.bf16.mxu0 0
      %2209 = vmatpush1.bf16.msra.mxu0 0
      %2210 = vmatprep.subr.bf16.mxu0 0
      %2211 = vmatpush1.bf16.msra.mxu0 0
      %2212 = vmatprep.mubr.bf16.mxu0 0
      %2213 = vmatmul.mubr.bf16.gmra.mrb[0].mxu0 %v1904
      %v2214 = vpop.f32.mrb[0].mxu0
      %v2215 = vadd.f32 %v2118, %v2214
      %v2216 = vpop.f32.mrb[0].mxu0
      %v2217 = vpop.f32.mrb[0].mxu0
      %v2218 = vadd.f32 %v2121, %v2217
      %v2219 = vpop.f32.mrb[0].mxu0
      %2220 = vmatprep.mubr.bf16.mxu0 0
      %2221 = vmatmul.mubr.bf16.gmra.mrb[0].mxu0 %v1907
      %v2222 = vpop.f32.mrb[0].mxu0
      %v2223 = vadd.f32 %v2126, %v2222
      %v2224 = vpop.f32.mrb[0].mxu0
      %v2225 = vpop.f32.mrb[0].mxu0
      %v2226 = vadd.f32 %v2129, %v2225
      %v2227 = vpop.f32.mrb[0].mxu0
      %2228 = vmatprep.mubr.bf16.mxu0 0
      %2229 = vmatmul.mubr.bf16.gmra.mrb[0].mxu0 %v1910
      %v2230 = vpop.f32.mrb[0].mxu0
      %v2231 = vadd.f32 %v2134, %v2230
      %v2232 = vpop.f32.mrb[0].mxu0
      %v2233 = vpop.f32.mrb[0].mxu0
      %v2234 = vadd.f32 %v2137, %v2233
      %v2235 = vpop.f32.mrb[0].mxu0
      %2236 = vmatprep.mubr.bf16.mxu0 0
      %2237 = vmatmul.mubr.bf16.gmra.mrb[0].mxu0 %v1913
      %v2238 = vpop.f32.mrb[0].mxu0
      %v2239 = vadd.f32 %v2142, %v2238
      %v2240 = vpop.f32.mrb[0].mxu0
      %v2241 = vpop.f32.mrb[0].mxu0
      %v2242 = vadd.f32 %v2145, %v2241
      %v2243 = vpop.f32.mrb[0].mxu0
      %2244 = vmatprep.mubr.bf16.mxu0 0
      %2245 = vmatmul.mubr.bf16.gmra.mrb[0].mxu0 %v1916
      %v2246 = vpop.f32.mrb[0].mxu0
      %v2247 = vadd.f32 %v2150, %v2246
      %v2248 = vpop.f32.mrb[0].mxu0
      %v2249 = vpop.f32.mrb[0].mxu0
      %v2250 = vadd.f32 %v2153, %v2249
      %v2251 = vpop.f32.mrb[0].mxu0
      %2252 = vmatprep.mubr.bf16.mxu0 0
      %2253 = vmatmul.mubr.bf16.gmra.mrb[0].mxu0 %v1919
      %v2254 = vpop.f32.mrb[0].mxu0
      %v2255 = vadd.f32 %v2158, %v2254
      %v2256 = vpop.f32.mrb[0].mxu0
      %v2257 = vpop.f32.mrb[0].mxu0
      %v2258 = vadd.f32 %v2161, %v2257
      %v2259 = vpop.f32.mrb[0].mxu0
      %2260 = vmatprep.mubr.bf16.mxu0 0
      %2261 = vmatmul.mubr.bf16.gmra.mrb[0].mxu0 %v1922
      %v2262 = vpop.f32.mrb[0].mxu0
      %v2263 = vadd.f32 %v2166, %v2262
      %v2264 = vpop.f32.mrb[0].mxu0
      %v2265 = vpop.f32.mrb[0].mxu0
      %v2266 = vadd.f32 %v2169, %v2265
      %v2267 = vpop.f32.mrb[0].mxu0
      %2268 = vmatprep.mubr.bf16.mxu0 0
      %2269 = vmatmul.mubr.bf16.gmra.mrb[0].mxu0 %v1925
      %v2270 = vpop.f32.mrb[0].mxu0
      %v2271 = vadd.f32 %v2174, %v2270
      %v2272 = vpop.f32.mrb[0].mxu0
      %v2273 = vpop.f32.mrb[0].mxu0
      %v2274 = vadd.f32 %v2177, %v2273
      %v2275 = vpop.f32.mrb[0].mxu0
      %2276 = vdwg.mxu0
      %v2325 = vunpack.c.l.b16 %v1484
      %v2326 = vunpack.c.l.b16 %v1485
      %v2327 = vunpack.c.l.b16 %v1486
      %v2328 = vunpack.c.l.b16 %v1487
      %v2329 = vunpack.c.l.b16 %v1488
      %v2330 = vunpack.c.l.b16 %v1489
      %v2331 = vunpack.c.l.b16 %v1490
      %v2332 = vunpack.c.l.b16 %v1491
      %v2333 = vunpack.c.l.b16 %v1492
      %v2334 = vunpack.c.l.b16 %v1493
      %v2335 = vunpack.c.l.b16 %v1494
      %v2336 = vunpack.c.l.b16 %v1495
      %v2337 = vunpack.c.l.b16 %v1496
      %v2338 = vunpack.c.l.b16 %v1497
      %v2339 = vunpack.c.l.b16 %v1498
      %v2340 = vunpack.c.l.b16 %v1499
      %v2341 = vunpack.c.l.b16 %v1500
      %v2342 = vunpack.c.l.b16 %v1501
      %v2343 = vunpack.c.l.b16 %v1502
      %v2344 = vunpack.c.l.b16 %v1503
      %v2345 = vunpack.c.l.b16 %v1504
      %v2346 = vunpack.c.l.b16 %v1505
      %v2347 = vunpack.c.l.b16 %v1506
      %v2348 = vunpack.c.l.b16 %v1507
      %v2349 = vunpack.c.l.b16 %v1508
      %v2350 = vunpack.c.l.b16 %v1509
      %v2351 = vunpack.c.l.b16 %v1510
      %v2352 = vunpack.c.l.b16 %v1511
      %v2353 = vunpack.c.l.b16 %v1512
      %v2354 = vunpack.c.l.b16 %v1513
      %v2355 = vunpack.c.l.b16 %v1514
      %v2356 = vunpack.c.l.b16 %v1515
      %v2357 = vunpack.c.l.b16 %v1516
      %v2358 = vunpack.c.l.b16 %v1517
      %v2359 = vunpack.c.l.b16 %v1518
      %v2360 = vunpack.c.l.b16 %v1519
      %v2361 = vunpack.c.l.b16 %v1520
      %v2362 = vunpack.c.l.b16 %v1521
      %v2363 = vunpack.c.l.b16 %v1522
      %v2364 = vunpack.c.l.b16 %v1523
      %v2365 = vunpack.c.l.b16 %v1524
      %v2366 = vunpack.c.l.b16 %v1525
      %v2367 = vunpack.c.l.b16 %v1526
      %v2368 = vunpack.c.l.b16 %v1527
      %v2369 = vunpack.c.l.b16 %v1528
      %v2370 = vunpack.c.l.b16 %v1529
      %v2371 = vunpack.c.l.b16 %v1530
      %v2372 = vunpack.c.l.b16 %v1531
      %v2373 = vpack.c.b16 %v2326, %v2325
      %v2374 = vpack.c.b16 %v2328, %v2327
      %v2375 = vpack.c.b16 %v2330, %v2329
      %v2376 = vpack.c.b16 %v2332, %v2331
      %v2377 = vpack.c.b16 %v2334, %v2333
      %v2378 = vpack.c.b16 %v2336, %v2335
      %v2379 = vpack.c.b16 %v2338, %v2337
      %v2380 = vpack.c.b16 %v2340, %v2339
      %v2381 = vpack.c.b16 %v2342, %v2341
      %v2382 = vpack.c.b16 %v2344, %v2343
      %v2383 = vpack.c.b16 %v2346, %v2345
      %v2384 = vpack.c.b16 %v2348, %v2347
      %v2385 = vpack.c.b16 %v2350, %v2349
      %v2386 = vpack.c.b16 %v2352, %v2351
      %v2387 = vpack.c.b16 %v2354, %v2353
      %v2388 = vpack.c.b16 %v2356, %v2355
      %v2389 = vpack.c.b16 %v2358, %v2357
      %v2390 = vpack.c.b16 %v2360, %v2359
      %v2391 = vpack.c.b16 %v2362, %v2361
      %v2392 = vpack.c.b16 %v2364, %v2363
      %v2393 = vpack.c.b16 %v2366, %v2365
      %v2394 = vpack.c.b16 %v2368, %v2367
      %v2395 = vpack.c.b16 %v2370, %v2369
      %v2396 = vpack.c.b16 %v2372, %v2371
      %2421 = vmatprep.subr.bf16.mxu0 0
      %2422 = vmatpush1.bf16.msra.mxu0 %v2373
      %2423 = vmatprep.subr.bf16.mxu0 0
      %2424 = vmatpush1.bf16.msra.mxu0 %v2374
      %2425 = vmatprep.subr.bf16.mxu0 0
      %2426 = vmatpush1.bf16.msra.mxu0 %v2375
      %2427 = vmatprep.subr.bf16.mxu0 0
      %2428 = vmatpush1.bf16.msra.mxu0 %v2376
      %2429 = vmatprep.subr.bf16.mxu0 0
      %2430 = vmatpush1.bf16.msra.mxu0 %v2377
      %2431 = vmatprep.subr.bf16.mxu0 0
      %2432 = vmatpush1.bf16.msra.mxu0 %v2378
      %2433 = vmatprep.subr.bf16.mxu0 0
      %2434 = vmatpush1.bf16.msra.mxu0 %v2379
      %2435 = vmatprep.subr.bf16.mxu0 0
      %2436 = vmatpush1.bf16.msra.mxu0 %v2380
      %2437 = vmatprep.subr.bf16.mxu0 0
      %2438 = vmatpush1.bf16.msra.mxu0 %v2381
      %2439 = vmatprep.subr.bf16.mxu0 0
      %2440 = vmatpush1.bf16.msra.mxu0 %v2382
      %2441 = vmatprep.subr.bf16.mxu0 0
      %2442 = vmatpush1.bf16.msra.mxu0 %v2383
      %2443 = vmatprep.subr.bf16.mxu0 0
      %2444 = vmatpush1.bf16.msra.mxu0 %v2384
      %2445 = vmatprep.subr.bf16.mxu0 0
      %2446 = vmatpush1.bf16.msra.mxu0 %v2385
      %2447 = vmatprep.subr.bf16.mxu0 0
      %2448 = vmatpush1.bf16.msra.mxu0 %v2386
      %2449 = vmatprep.subr.bf16.mxu0 0
      %2450 = vmatpush1.bf16.msra.mxu0 %v2387
      %2451 = vmatprep.subr.bf16.mxu0 0
      %2452 = vmatpush1.bf16.msra.mxu0 %v2388
      %2453 = vmatprep.mubr.bf16.mxu0 %v1760
      %2454 = vmatmul.mubr.bf16.gmra.mrb[0].mxu0 %v1729
      %v2455 = vpop.f32.mrb[0].mxu0
      %v2456 = vadd.f32 %v2215, %v2455
      %v2457 = vpop.f32.mrb[0].mxu0
      %v2458 = vpop.f32.mrb[0].mxu0
      %v2459 = vadd.f32 %v2218, %v2458
      %v2460 = vpop.f32.mrb[0].mxu0
      %2461 = vmatprep.mubr.bf16.mxu0 %v1772
      %2462 = vmatmul.mubr.bf16.gmra.mrb[0].mxu0 %v1730
      %v2463 = vpop.f32.mrb[0].mxu0
      %v2464 = vadd.f32 %v2223, %v2463
      %v2465 = vpop.f32.mrb[0].mxu0
      %v2466 = vpop.f32.mrb[0].mxu0
      %v2467 = vadd.f32 %v2226, %v2466
      %v2468 = vpop.f32.mrb[0].mxu0
      %2469 = vmatprep.mubr.bf16.mxu0 %v1784
      %2470 = vmatmul.mubr.bf16.gmra.mrb[0].mxu0 %v1731
      %v2471 = vpop.f32.mrb[0].mxu0
      %v2472 = vadd.f32 %v2231, %v2471
      %v2473 = vpop.f32.mrb[0].mxu0
      %v2474 = vpop.f32.mrb[0].mxu0
      %v2475 = vadd.f32 %v2234, %v2474
      %v2476 = vpop.f32.mrb[0].mxu0
      %2477 = vmatprep.mubr.bf16.mxu0 %v1796
      %2478 = vmatmul.mubr.bf16.gmra.mrb[0].mxu0 %v1732
      %v2479 = vpop.f32.mrb[0].mxu0
      %v2480 = vadd.f32 %v2239, %v2479
      %v2481 = vpop.f32.mrb[0].mxu0
      %v2482 = vpop.f32.mrb[0].mxu0
      %v2483 = vadd.f32 %v2242, %v2482
      %v2484 = vpop.f32.mrb[0].mxu0
      %2485 = vmatprep.mubr.bf16.mxu0 %v1808
      %2486 = vmatmul.mubr.bf16.gmra.mrb[0].mxu0 %v1733
      %v2487 = vpop.f32.mrb[0].mxu0
      %v2488 = vadd.f32 %v2247, %v2487
      %v2489 = vpop.f32.mrb[0].mxu0
      %v2490 = vpop.f32.mrb[0].mxu0
      %v2491 = vadd.f32 %v2250, %v2490
      %v2492 = vpop.f32.mrb[0].mxu0
      %2493 = vmatprep.mubr.bf16.mxu0 %v1820
      %2494 = vmatmul.mubr.bf16.gmra.mrb[0].mxu0 %v1734
      %v2495 = vpop.f32.mrb[0].mxu0
      %v2496 = vadd.f32 %v2255, %v2495
      %v2497 = vpop.f32.mrb[0].mxu0
      %v2498 = vpop.f32.mrb[0].mxu0
      %v2499 = vadd.f32 %v2258, %v2498
      %v2500 = vpop.f32.mrb[0].mxu0
      %2501 = vmatprep.mubr.bf16.mxu0 %v1832
      %2502 = vmatmul.mubr.bf16.gmra.mrb[0].mxu0 %v1735
      %v2503 = vpop.f32.mrb[0].mxu0
      %v2504 = vadd.f32 %v2263, %v2503
      %v2505 = vpop.f32.mrb[0].mxu0
      %v2506 = vpop.f32.mrb[0].mxu0
      %v2507 = vadd.f32 %v2266, %v2506
      %v2508 = vpop.f32.mrb[0].mxu0
      %2509 = vmatprep.mubr.bf16.mxu0 %v1844
      %2510 = vmatmul.mubr.bf16.gmra.mrb[0].mxu0 %v1736
      %v2511 = vpop.f32.mrb[0].mxu0
      %v2512 = vadd.f32 %v2271, %v2511
      %v2513 = vpop.f32.mrb[0].mxu0
      %v2514 = vpop.f32.mrb[0].mxu0
      %v2515 = vadd.f32 %v2274, %v2514
      %v2516 = vpop.f32.mrb[0].mxu0
      %2517 = vdwg.mxu0
      %2518 = vmatprep.subr.bf16.mxu0 0
      %2519 = vmatpush1.bf16.msra.mxu0 %v2389
      %2520 = vmatprep.subr.bf16.mxu0 0
      %2521 = vmatpush1.bf16.msra.mxu0 %v2390
      %2522 = vmatprep.subr.bf16.mxu0 0
      %2523 = vmatpush1.bf16.msra.mxu0 %v2391
      %2524 = vmatprep.subr.bf16.mxu0 0
      %2525 = vmatpush1.bf16.msra.mxu0 %v2392
      %2526 = vmatprep.subr.bf16.mxu0 0
      %2527 = vmatpush1.bf16.msra.mxu0 %v2393
      %2528 = vmatprep.subr.bf16.mxu0 0
      %2529 = vmatpush1.bf16.msra.mxu0 %v2394
      %2530 = vmatprep.subr.bf16.mxu0 0
      %2531 = vmatpush1.bf16.msra.mxu0 %v2395
      %2532 = vmatprep.subr.bf16.mxu0 0
      %2533 = vmatpush1.bf16.msra.mxu0 %v2396
      %2534 = vmatprep.subr.bf16.mxu0 0
      %2535 = vmatpush1.bf16.msra.mxu0 0
      %2536 = vmatprep.subr.bf16.mxu0 0
      %2537 = vmatpush1.bf16.msra.mxu0 0
      %2538 = vmatprep.subr.bf16.mxu0 0
      %2539 = vmatpush1.bf16.msra.mxu0 0
      %2540 = vmatprep.subr.bf16.mxu0 0
      %2541 = vmatpush1.bf16.msra.mxu0 0
      %2542 = vmatprep.subr.bf16.mxu0 0
      %2543 = vmatpush1.bf16.msra.mxu0 0
      %2544 = vmatprep.subr.bf16.mxu0 0
      %2545 = vmatpush1.bf16.msra.mxu0 0
      %2546 = vmatprep.subr.bf16.mxu0 0
      %2547 = vmatpush1.bf16.msra.mxu0 0
      %2548 = vmatprep.subr.bf16.mxu0 0
      %2549 = vmatpush1.bf16.msra.mxu0 0
      %2550 = vmatprep.mubr.bf16.mxu0 0
      %2551 = vmatmul.mubr.bf16.gmra.mrb[0].mxu0 %v1901
      %v2552 = vpop.f32.mrb[0].mxu0
      %v2553 = vadd.f32 %v2456, %v2552
      %v2554 = vpop.f32.mrb[0].mxu0
      %v2555 = vpop.f32.mrb[0].mxu0
      %v2556 = vadd.f32 %v2459, %v2555
      %v2557 = vpop.f32.mrb[0].mxu0
      %2558 = vmatprep.mubr.bf16.mxu0 0
      %2559 = vmatmul.mubr.bf16.gmra.mrb[0].mxu0 %v1904
      %v2560 = vpop.f32.mrb[0].mxu0
      %v2561 = vadd.f32 %v2464, %v2560
      %v2562 = vpop.f32.mrb[0].mxu0
      %v2563 = vpop.f32.mrb[0].mxu0
      %v2564 = vadd.f32 %v2467, %v2563
      %v2565 = vpop.f32.mrb[0].mxu0
      %2566 = vmatprep.mubr.bf16.mxu0 0
      %2567 = vmatmul.mubr.bf16.gmra.mrb[0].mxu0 %v1907
      %v2568 = vpop.f32.mrb[0].mxu0
      %v2569 = vadd.f32 %v2472, %v2568
      %v2570 = vpop.f32.mrb[0].mxu0
      %v2571 = vpop.f32.mrb[0].mxu0
      %v2572 = vadd.f32 %v2475, %v2571
      %v2573 = vpop.f32.mrb[0].mxu0
      %2574 = vmatprep.mubr.bf16.mxu0 0
      %2575 = vmatmul.mubr.bf16.gmra.mrb[0].mxu0 %v1910
      %v2576 = vpop.f32.mrb[0].mxu0
      %v2577 = vadd.f32 %v2480, %v2576
      %v2578 = vpop.f32.mrb[0].mxu0
      %v2579 = vpop.f32.mrb[0].mxu0
      %v2580 = vadd.f32 %v2483, %v2579
      %v2581 = vpop.f32.mrb[0].mxu0
      %2582 = vmatprep.mubr.bf16.mxu0 0
      %2583 = vmatmul.mubr.bf16.gmra.mrb[0].mxu0 %v1913
      %v2584 = vpop.f32.mrb[0].mxu0
      %v2585 = vadd.f32 %v2488, %v2584
      %v2586 = vpop.f32.mrb[0].mxu0
      %v2587 = vpop.f32.mrb[0].mxu0
      %v2588 = vadd.f32 %v2491, %v2587
      %v2589 = vpop.f32.mrb[0].mxu0
      %2590 = vmatprep.mubr.bf16.mxu0 0
      %2591 = vmatmul.mubr.bf16.gmra.mrb[0].mxu0 %v1916
      %v2592 = vpop.f32.mrb[0].mxu0
      %v2593 = vadd.f32 %v2496, %v2592
      %v2594 = vpop.f32.mrb[0].mxu0
      %v2595 = vpop.f32.mrb[0].mxu0
      %v2596 = vadd.f32 %v2499, %v2595
      %v2597 = vpop.f32.mrb[0].mxu0
      %2598 = vmatprep.mubr.bf16.mxu0 0
      %2599 = vmatmul.mubr.bf16.gmra.mrb[0].mxu0 %v1919
      %v2600 = vpop.f32.mrb[0].mxu0
      %v2601 = vadd.f32 %v2504, %v2600
      %v2602 = vpop.f32.mrb[0].mxu0
      %v2603 = vpop.f32.mrb[0].mxu0
      %v2604 = vadd.f32 %v2507, %v2603
      %v2605 = vpop.f32.mrb[0].mxu0
      %2606 = vmatprep.mubr.bf16.mxu0 0
      %2607 = vmatmul.mubr.bf16.gmra.mrb[0].mxu0 %v1922
      %v2608 = vpop.f32.mrb[0].mxu0
      %v2609 = vadd.f32 %v2512, %v2608
      %v2610 = vpop.f32.mrb[0].mxu0
      %v2611 = vpop.f32.mrb[0].mxu0
      %v2612 = vadd.f32 %v2515, %v2611
      %v2613 = vpop.f32.mrb[0].mxu0
      %2614 = vdwg.mxu0
      %v2663 = vunpack.c.l.b16 %v1580
      %v2664 = vunpack.c.l.b16 %v1581
      %v2665 = vunpack.c.l.b16 %v1582
      %v2666 = vunpack.c.l.b16 %v1583
      %v2667 = vunpack.c.l.b16 %v1584
      %v2668 = vunpack.c.l.b16 %v1585
      %v2669 = vunpack.c.l.b16 %v1586
      %v2670 = vunpack.c.l.b16 %v1587
      %v2671 = vunpack.c.l.b16 %v1588
      %v2672 = vunpack.c.l.b16 %v1589
      %v2673 = vunpack.c.l.b16 %v1590
      %v2674 = vunpack.c.l.b16 %v1591
      %v2675 = vunpack.c.l.b16 %v1592
      %v2676 = vunpack.c.l.b16 %v1593
      %v2677 = vunpack.c.l.b16 %v1594
      %v2678 = vunpack.c.l.b16 %v1595
      %v2679 = vunpack.c.l.b16 %v1596
      %v2680 = vunpack.c.l.b16 %v1597
      %v2681 = vunpack.c.l.b16 %v1598
      %v2682 = vunpack.c.l.b16 %v1599
      %v2683 = vunpack.c.l.b16 %v1600
      %v2684 = vunpack.c.l.b16 %v1601
      %v2685 = vunpack.c.l.b16 %v1602
      %v2686 = vunpack.c.l.b16 %v1603
      %v2687 = vunpack.c.l.b16 %v1604
      %v2688 = vunpack.c.l.b16 %v1605
      %v2689 = vunpack.c.l.b16 %v1606
      %v2690 = vunpack.c.l.b16 %v1607
      %v2691 = vunpack.c.l.b16 %v1608
      %v2692 = vunpack.c.l.b16 %v1609
      %v2693 = vunpack.c.l.b16 %v1610
      %v2694 = vunpack.c.l.b16 %v1611
      %v2695 = vunpack.c.l.b16 %v1612
      %v2696 = vunpack.c.l.b16 %v1613
      %v2697 = vunpack.c.l.b16 %v1614
      %v2698 = vunpack.c.l.b16 %v1615
      %v2699 = vunpack.c.l.b16 %v1616
      %v2700 = vunpack.c.l.b16 %v1617
      %v2701 = vunpack.c.l.b16 %v1618
      %v2702 = vunpack.c.l.b16 %v1619
      %v2703 = vunpack.c.l.b16 %v1620
      %v2704 = vunpack.c.l.b16 %v1621
      %v2705 = vunpack.c.l.b16 %v1622
      %v2706 = vunpack.c.l.b16 %v1623
      %v2707 = vunpack.c.l.b16 %v1624
      %v2708 = vunpack.c.l.b16 %v1625
      %v2709 = vunpack.c.l.b16 %v1626
      %v2710 = vunpack.c.l.b16 %v1627
      %v2711 = vpack.c.b16 %v2664, %v2663
      %v2712 = vpack.c.b16 %v2666, %v2665
      %v2713 = vpack.c.b16 %v2668, %v2667
      %v2714 = vpack.c.b16 %v2670, %v2669
      %v2715 = vpack.c.b16 %v2672, %v2671
      %v2716 = vpack.c.b16 %v2674, %v2673
      %v2717 = vpack.c.b16 %v2676, %v2675
      %v2718 = vpack.c.b16 %v2678, %v2677
      %v2719 = vpack.c.b16 %v2680, %v2679
      %v2720 = vpack.c.b16 %v2682, %v2681
      %v2721 = vpack.c.b16 %v2684, %v2683
      %v2722 = vpack.c.b16 %v2686, %v2685
      %v2723 = vpack.c.b16 %v2688, %v2687
      %v2724 = vpack.c.b16 %v2690, %v2689
      %v2725 = vpack.c.b16 %v2692, %v2691
      %v2726 = vpack.c.b16 %v2694, %v2693
      %v2727 = vpack.c.b16 %v2696, %v2695
      %v2728 = vpack.c.b16 %v2698, %v2697
      %v2729 = vpack.c.b16 %v2700, %v2699
      %v2730 = vpack.c.b16 %v2702, %v2701
      %v2731 = vpack.c.b16 %v2704, %v2703
      %v2732 = vpack.c.b16 %v2706, %v2705
      %v2733 = vpack.c.b16 %v2708, %v2707
      %v2734 = vpack.c.b16 %v2710, %v2709
      %2759 = vmatprep.subr.bf16.mxu0 0
      %2760 = vmatpush1.bf16.msra.mxu0 %v2711
      %2761 = vmatprep.subr.bf16.mxu0 0
      %2762 = vmatpush1.bf16.msra.mxu0 %v2712
      %2763 = vmatprep.subr.bf16.mxu0 0
      %2764 = vmatpush1.bf16.msra.mxu0 %v2713
      %2765 = vmatprep.subr.bf16.mxu0 0
      %2766 = vmatpush1.bf16.msra.mxu0 %v2714
      %2767 = vmatprep.subr.bf16.mxu0 0
      %2768 = vmatpush1.bf16.msra.mxu0 %v2715
      %2769 = vmatprep.subr.bf16.mxu0 0
      %2770 = vmatpush1.bf16.msra.mxu0 %v2716
      %2771 = vmatprep.subr.bf16.mxu0 0
      %2772 = vmatpush1.bf16.msra.mxu0 %v2717
      %2773 = vmatprep.subr.bf16.mxu0 0
      %2774 = vmatpush1.bf16.msra.mxu0 %v2718
      %2775 = vmatprep.subr.bf16.mxu0 0
      %2776 = vmatpush1.bf16.msra.mxu0 %v2719
      %2777 = vmatprep.subr.bf16.mxu0 0
      %2778 = vmatpush1.bf16.msra.mxu0 %v2720
      %2779 = vmatprep.subr.bf16.mxu0 0
      %2780 = vmatpush1.bf16.msra.mxu0 %v2721
      %2781 = vmatprep.subr.bf16.mxu0 0
      %2782 = vmatpush1.bf16.msra.mxu0 %v2722
      %2783 = vmatprep.subr.bf16.mxu0 0
      %2784 = vmatpush1.bf16.msra.mxu0 %v2723
      %2785 = vmatprep.subr.bf16.mxu0 0
      %2786 = vmatpush1.bf16.msra.mxu0 %v2724
      %2787 = vmatprep.subr.bf16.mxu0 0
      %2788 = vmatpush1.bf16.msra.mxu0 %v2725
      %2789 = vmatprep.subr.bf16.mxu0 0
      %2790 = vmatpush1.bf16.msra.mxu0 %v2726
      %2791 = vmatprep.mubr.bf16.mxu0 %v1784
      %2792 = vmatmul.mubr.bf16.gmra.mrb[0].mxu0 %v1731
      %v2793 = vpop.f32.mrb[0].mxu0
      %v2794 = vadd.f32 0.0, %v2793
      %v2795 = vpop.f32.mrb[0].mxu0
      %v2796 = vpop.f32.mrb[0].mxu0
      %v2797 = vadd.f32 0.0, %v2796
      %v2798 = vpop.f32.mrb[0].mxu0
      %2799 = vmatprep.mubr.bf16.mxu0 %v1796
      %2800 = vmatmul.mubr.bf16.gmra.mrb[0].mxu0 %v1732
      %v2801 = vpop.f32.mrb[0].mxu0
      %v2802 = vadd.f32 0.0, %v2801
      %v2803 = vpop.f32.mrb[0].mxu0
      %v2804 = vpop.f32.mrb[0].mxu0
      %v2805 = vadd.f32 0.0, %v2804
      %v2806 = vpop.f32.mrb[0].mxu0
      %2807 = vmatprep.mubr.bf16.mxu0 %v1808
      %2808 = vmatmul.mubr.bf16.gmra.mrb[0].mxu0 %v1733
      %v2809 = vpop.f32.mrb[0].mxu0
      %v2810 = vadd.f32 0.0, %v2809
      %v2811 = vpop.f32.mrb[0].mxu0
      %v2812 = vpop.f32.mrb[0].mxu0
      %v2813 = vadd.f32 0.0, %v2812
      %v2814 = vpop.f32.mrb[0].mxu0
      %2815 = vmatprep.mubr.bf16.mxu0 %v1820
      %2816 = vmatmul.mubr.bf16.gmra.mrb[0].mxu0 %v1734
      %v2817 = vpop.f32.mrb[0].mxu0
      %v2818 = vadd.f32 0.0, %v2817
      %v2819 = vpop.f32.mrb[0].mxu0
      %v2820 = vpop.f32.mrb[0].mxu0
      %v2821 = vadd.f32 0.0, %v2820
      %v2822 = vpop.f32.mrb[0].mxu0
      %2823 = vmatprep.mubr.bf16.mxu0 %v1832
      %2824 = vmatmul.mubr.bf16.gmra.mrb[0].mxu0 %v1735
      %v2825 = vpop.f32.mrb[0].mxu0
      %v2826 = vadd.f32 0.0, %v2825
      %v2827 = vpop.f32.mrb[0].mxu0
      %v2828 = vpop.f32.mrb[0].mxu0
      %v2829 = vadd.f32 0.0, %v2828
      %v2830 = vpop.f32.mrb[0].mxu0
      %2831 = vmatprep.mubr.bf16.mxu0 %v1844
      %2832 = vmatmul.mubr.bf16.gmra.mrb[0].mxu0 %v1736
      %v2833 = vpop.f32.mrb[0].mxu0
      %v2834 = vadd.f32 0.0, %v2833
      %v2835 = vpop.f32.mrb[0].mxu0
      %v2836 = vpop.f32.mrb[0].mxu0
      %v2837 = vadd.f32 0.0, %v2836
      %v2838 = vpop.f32.mrb[0].mxu0
      %2839 = vmatprep.mubr.bf16.mxu0 %v1856
      %2840 = vmatmul.mubr.bf16.gmra.mrb[0].mxu0 %v1737
      %v2841 = vpop.f32.mrb[0].mxu0
      %v2842 = vadd.f32 0.0, %v2841
      %v2843 = vpop.f32.mrb[0].mxu0
      %v2844 = vpop.f32.mrb[0].mxu0
      %v2845 = vadd.f32 0.0, %v2844
      %v2846 = vpop.f32.mrb[0].mxu0
      %2847 = vmatprep.mubr.bf16.mxu0 %v1868
      %2848 = vmatmul.mubr.bf16.gmra.mrb[0].mxu0 %v1738
      %v2849 = vpop.f32.mrb[0].mxu0
      %v2850 = vadd.f32 0.0, %v2849
      %v2851 = vpop.f32.mrb[0].mxu0
      %v2852 = vpop.f32.mrb[0].mxu0
      %v2853 = vadd.f32 0.0, %v2852
      %v2854 = vpop.f32.mrb[0].mxu0
      %2855 = vdwg.mxu0
      %2856 = vmatprep.subr.bf16.mxu0 0
      %2857 = vmatpush1.bf16.msra.mxu0 %v2727
      %2858 = vmatprep.subr.bf16.mxu0 0
      %2859 = vmatpush1.bf16.msra.mxu0 %v2728
      %2860 = vmatprep.subr.bf16.mxu0 0
      %2861 = vmatpush1.bf16.msra.mxu0 %v2729
      %2862 = vmatprep.subr.bf16.mxu0 0
      %2863 = vmatpush1.bf16.msra.mxu0 %v2730
      %2864 = vmatprep.subr.bf16.mxu0 0
      %2865 = vmatpush1.bf16.msra.mxu0 %v2731
      %2866 = vmatprep.subr.bf16.mxu0 0
      %2867 = vmatpush1.bf16.msra.mxu0 %v2732
      %2868 = vmatprep.subr.bf16.mxu0 0
      %2869 = vmatpush1.bf16.msra.mxu0 %v2733
      %2870 = vmatprep.subr.bf16.mxu0 0
      %2871 = vmatpush1.bf16.msra.mxu0 %v2734
      %2872 = vmatprep.subr.bf16.mxu0 0
      %2873 = vmatpush1.bf16.msra.mxu0 0
      %2874 = vmatprep.subr.bf16.mxu0 0
      %2875 = vmatpush1.bf16.msra.mxu0 0
      %2876 = vmatprep.subr.bf16.mxu0 0
      %2877 = vmatpush1.bf16.msra.mxu0 0
      %2878 = vmatprep.subr.bf16.mxu0 0
      %2879 = vmatpush1.bf16.msra.mxu0 0
      %2880 = vmatprep.subr.bf16.mxu0 0
      %2881 = vmatpush1.bf16.msra.mxu0 0
      %2882 = vmatprep.subr.bf16.mxu0 0
      %2883 = vmatpush1.bf16.msra.mxu0 0
      %2884 = vmatprep.subr.bf16.mxu0 0
      %2885 = vmatpush1.bf16.msra.mxu0 0
      %2886 = vmatprep.subr.bf16.mxu0 0
      %2887 = vmatpush1.bf16.msra.mxu0 0
      %2888 = vmatprep.mubr.bf16.mxu0 0
      %2889 = vmatmul.mubr.bf16.gmra.mrb[0].mxu0 %v1907
      %v2890 = vpop.f32.mrb[0].mxu0
      %v2891 = vadd.f32 %v2794, %v2890
      %v2892 = vpop.f32.mrb[0].mxu0
      %v2893 = vpop.f32.mrb[0].mxu0
      %v2894 = vadd.f32 %v2797, %v2893
      %v2895 = vpop.f32.mrb[0].mxu0
      %2896 = vmatprep.mubr.bf16.mxu0 0
      %2897 = vmatmul.mubr.bf16.gmra.mrb[0].mxu0 %v1910
      %v2898 = vpop.f32.mrb[0].mxu0
      %v2899 = vadd.f32 %v2802, %v2898
      %v2900 = vpop.f32.mrb[0].mxu0
      %v2901 = vpop.f32.mrb[0].mxu0
      %v2902 = vadd.f32 %v2805, %v2901
      %v2903 = vpop.f32.mrb[0].mxu0
      %2904 = vmatprep.mubr.bf16.mxu0 0
      %2905 = vmatmul.mubr.bf16.gmra.mrb[0].mxu0 %v1913
      %v2906 = vpop.f32.mrb[0].mxu0
      %v2907 = vadd.f32 %v2810, %v2906
      %v2908 = vpop.f32.mrb[0].mxu0
      %v2909 = vpop.f32.mrb[0].mxu0
      %v2910 = vadd.f32 %v2813, %v2909
      %v2911 = vpop.f32.mrb[0].mxu0
      %2912 = vmatprep.mubr.bf16.mxu0 0
      %2913 = vmatmul.mubr.bf16.gmra.mrb[0].mxu0 %v1916
      %v2914 = vpop.f32.mrb[0].mxu0
      %v2915 = vadd.f32 %v2818, %v2914
      %v2916 = vpop.f32.mrb[0].mxu0
      %v2917 = vpop.f32.mrb[0].mxu0
      %v2918 = vadd.f32 %v2821, %v2917
      %v2919 = vpop.f32.mrb[0].mxu0
      %2920 = vmatprep.mubr.bf16.mxu0 0
      %2921 = vmatmul.mubr.bf16.gmra.mrb[0].mxu0 %v1919
      %v2922 = vpop.f32.mrb[0].mxu0
      %v2923 = vadd.f32 %v2826, %v2922
      %v2924 = vpop.f32.mrb[0].mxu0
      %v2925 = vpop.f32.mrb[0].mxu0
      %v2926 = vadd.f32 %v2829, %v2925
      %v2927 = vpop.f32.mrb[0].mxu0
      %2928 = vmatprep.mubr.bf16.mxu0 0
      %2929 = vmatmul.mubr.bf16.gmra.mrb[0].mxu0 %v1922
      %v2930 = vpop.f32.mrb[0].mxu0
      %v2931 = vadd.f32 %v2834, %v2930
      %v2932 = vpop.f32.mrb[0].mxu0
      %v2933 = vpop.f32.mrb[0].mxu0
      %v2934 = vadd.f32 %v2837, %v2933
      %v2935 = vpop.f32.mrb[0].mxu0
      %2936 = vmatprep.mubr.bf16.mxu0 0
      %2937 = vmatmul.mubr.bf16.gmra.mrb[0].mxu0 %v1925
      %v2938 = vpop.f32.mrb[0].mxu0
      %v2939 = vadd.f32 %v2842, %v2938
      %v2940 = vpop.f32.mrb[0].mxu0
      %v2941 = vpop.f32.mrb[0].mxu0
      %v2942 = vadd.f32 %v2845, %v2941
      %v2943 = vpop.f32.mrb[0].mxu0
      %2944 = vmatprep.mubr.bf16.mxu0 0
      %2945 = vmatmul.mubr.bf16.gmra.mrb[0].mxu0 %v1928
      %v2946 = vpop.f32.mrb[0].mxu0
      %v2947 = vadd.f32 %v2850, %v2946
      %v2948 = vpop.f32.mrb[0].mxu0
      %v2949 = vpop.f32.mrb[0].mxu0
      %v2950 = vadd.f32 %v2853, %v2949
      %v2951 = vpop.f32.mrb[0].mxu0
      %2952 = vdwg.mxu0
      %v2953 = vadd.f32 %v2553, %v2891
      %v2954 = vadd.f32 %v2556, %v2894
      %v2955 = vadd.f32 %v2561, %v2899
      %v2956 = vadd.f32 %v2564, %v2902
      %v2957 = vadd.f32 %v2569, %v2907
      %v2958 = vadd.f32 %v2572, %v2910
      %v2959 = vadd.f32 %v2577, %v2915
      %v2960 = vadd.f32 %v2580, %v2918
      %v2961 = vadd.f32 %v2585, %v2923
      %v2962 = vadd.f32 %v2588, %v2926
      %v2963 = vadd.f32 %v2593, %v2931
      %v2964 = vadd.f32 %v2596, %v2934
      %v2965 = vadd.f32 %v2601, %v2939
      %v2966 = vadd.f32 %v2604, %v2942
      %v2967 = vadd.f32 %v2609, %v2947
      %v2968 = vadd.f32 %v2612, %v2950
      %v2970 = vlaneseq
      %v2971 = vshrl.u32 %v2970, 7
      %v2972 = vsub.s32 0, %v2971
      %v2973 = vrot.slane %v1628, %v2972
      %v2975 = vadd.f32 %v2953, %v2973
      %v2976 = vadd.f32 %v2954, %v2973
      %v2977 = vadd.f32 %v2955, %v2973
      %v2978 = vadd.f32 %v2956, %v2973
      %v2979 = vadd.f32 %v2957, %v2973
      %v2980 = vadd.f32 %v2958, %v2973
      %v2981 = vadd.f32 %v2959, %v2973
      %v2982 = vadd.f32 %v2960, %v2973
      %v2983 = vadd.f32 %v2961, %v2973
      %v2984 = vadd.f32 %v2962, %v2973
      %v2985 = vadd.f32 %v2963, %v2973
      %v2986 = vadd.f32 %v2964, %v2973
      %v2987 = vadd.f32 %v2965, %v2973
      %v2988 = vadd.f32 %v2966, %v2973
      %v2989 = vadd.f32 %v2967, %v2973
      %v2990 = vadd.f32 %v2968, %v2973
      %v2991 = vmax.f32 %v2975, 0.0
      %v2992 = vmax.f32 %v2976, 0.0
      %v2993 = vmax.f32 %v2977, 0.0
      %v2994 = vmax.f32 %v2978, 0.0
      %v2995 = vmax.f32 %v2979, 0.0
      %v2996 = vmax.f32 %v2980, 0.0
      %v2997 = vmax.f32 %v2981, 0.0
      %v2998 = vmax.f32 %v2982, 0.0
      %v2999 = vmax.f32 %v2983, 0.0
      %v3000 = vmax.f32 %v2984, 0.0
      %v3001 = vmax.f32 %v2985, 0.0
      %v3002 = vmax.f32 %v2986, 0.0
      %v3003 = vmax.f32 %v2987, 0.0
      %v3004 = vmax.f32 %v2988, 0.0
      %v3005 = vmax.f32 %v2989, 0.0
      %v3006 = vmax.f32 %v2990, 0.0
      %3007 = vst [vmem:[%s496] sm:$0xff] %v2991
      %3008 = vst [vmem:[%s496 + $0x8] sm:$0xff] %v2992
      %3009 = vst [vmem:[%s496 + $0x10] sm:$0xff] %v2993
      %3010 = vst [vmem:[%s496 + $0x18] sm:$0xff] %v2994
      %3011 = vst [vmem:[%s496 + $0x20] sm:$0xff] %v2995
      %3012 = vst [vmem:[%s496 + $0x28] sm:$0xff] %v2996
      %3013 = vst [vmem:[%s496 + $0x30] sm:$0xff] %v2997
      %3014 = vst [vmem:[%s496 + $0x38] sm:$0xff] %v2998
      %3015 = vst [vmem:[%s496 + $0x40] sm:$0xff] %v2999
      %3016 = vst [vmem:[%s496 + $0x48] sm:$0xff] %v3000
      %3017 = vst [vmem:[%s496 + $0x50] sm:$0xff] %v3001
      %3018 = vst [vmem:[%s496 + $0x58] sm:$0xff] %v3002
      %3019 = vst [vmem:[%s496 + $0x60] sm:$0xff] %v3003
      %3020 = vst [vmem:[%s496 + $0x68] sm:$0xff] %v3004
      %3021 = vst [vmem:[%s496 + $0x70] sm:$0xff] %v3005
      %3022 = vst [vmem:[%s496 + $0x78] sm:$0xff] %v3006
      %v3023 = vmax.f32 %v2991, %v2993
      %v3024 = vmax.f32 %v2992, %v2994
      %v3025 = vmax.f32 %v2995, %v2997
      %v3026 = vmax.f32 %v2996, %v2998
      %v3027 = vmax.f32 %v2999, %v3001
      %v3028 = vmax.f32 %v3000, %v3002
      %v3029 = vmax.f32 %v3003, %v3005
      %v3030 = vmax.f32 %v3004, %v3006
      %v3032 = vunpack.c.l.s4 1966171168
      %v3033 = vunpack.c.0.s8 %v3032
      %v3034 = vlaneseq
      %v3035 = vshrl.u32 %v3034, 7
      %v3036 = vsub.s32 %v3033, %v3035
      %v3037 = vrot.slane %v3023, %v3036
      %v3039 = vunpack.c.l.s4 1966171168
      %v3040 = vunpack.c.0.s8 %v3039
      %v3041 = vlaneseq
      %v3042 = vshrl.u32 %v3041, 7
      %v3043 = vsub.s32 %v3040, %v3042
      %v3044 = vrot.slane %v3024, %v3043
      %v3046 = vunpack.c.l.s4 1966171168
      %v3047 = vunpack.c.0.s8 %v3046
      %v3048 = vlaneseq
      %v3049 = vshrl.u32 %v3048, 7
      %v3050 = vsub.s32 %v3047, %v3049
      %v3051 = vrot.slane %v3025, %v3050
      %v3053 = vunpack.c.l.s4 1966171168
      %v3054 = vunpack.c.0.s8 %v3053
      %v3055 = vlaneseq
      %v3056 = vshrl.u32 %v3055, 7
      %v3057 = vsub.s32 %v3054, %v3056
      %v3058 = vrot.slane %v3026, %v3057
      %v3060 = vunpack.c.l.s4 1966171168
      %v3061 = vunpack.c.0.s8 %v3060
      %v3062 = vlaneseq
      %v3063 = vshrl.u32 %v3062, 7
      %v3064 = vsub.s32 %v3061, %v3063
      %v3065 = vrot.slane %v3027, %v3064
      %v3067 = vunpack.c.l.s4 1966171168
      %v3068 = vunpack.c.0.s8 %v3067
      %v3069 = vlaneseq
      %v3070 = vshrl.u32 %v3069, 7
      %v3071 = vsub.s32 %v3068, %v3070
      %v3072 = vrot.slane %v3028, %v3071
      %v3074 = vunpack.c.l.s4 1966171168
      %v3075 = vunpack.c.0.s8 %v3074
      %v3076 = vlaneseq
      %v3077 = vshrl.u32 %v3076, 7
      %v3078 = vsub.s32 %v3075, %v3077
      %v3079 = vrot.slane %v3029, %v3078
      %v3081 = vunpack.c.l.s4 1966171168
      %v3082 = vunpack.c.0.s8 %v3081
      %v3083 = vlaneseq
      %v3084 = vshrl.u32 %v3083, 7
      %v3085 = vsub.s32 %v3082, %v3084
      %v3086 = vrot.slane %v3030, %v3085
      %v3095 = vrot.slane %v3037, 4
      %v3096 = vrot.slane %v3044, 4
      %v3097 = vrot.slane %v3051, 4
      %v3098 = vrot.slane %v3058, 4
      %v3099 = vrot.slane %v3065, 4
      %v3100 = vrot.slane %v3072, 4
      %v3101 = vrot.slane %v3079, 4
      %v3102 = vrot.slane %v3086, 4
      %v3111 = vmax.f32 %v3037, %v3095
      %v3112 = vmax.f32 %v3044, %v3096
      %v3113 = vmax.f32 %v3051, %v3097
      %v3114 = vmax.f32 %v3058, %v3098
      %v3115 = vmax.f32 %v3065, %v3099
      %v3116 = vmax.f32 %v3072, %v3100
      %v3117 = vmax.f32 %v3079, %v3101
      %v3118 = vmax.f32 %v3086, %v3102
      %v3127 = vcombine.low %v3111, %v3112
      %v3128 = vcombine.low %v3113, %v3114
      %v3129 = vcombine.low %v3115, %v3116
      %v3130 = vcombine.low %v3117, %v3118
      %3135 = vst [vmem:[%s506] sm:$0xff] %v3127
      %3136 = vst [vmem:[%s506 + $0x8] sm:$0xff] %v3128
      %3137 = vst [vmem:[%s506 + $0x10] sm:$0xff] %v3129
      %3138 = vst [vmem:[%s506 + $0x18] sm:$0xff] %v3130
      %s3139 = smul.u32 8, %s25
      %p3140 = scmp.lt.s32.totalorder %s24, 1
      %s3141 = scalar_select %p3140, %s24, 1
      %p3142 = scmp.lt.s32.totalorder %s3139, 15
      %s3143 = scalar_select %p3142, %s3139, 15
      %s3144 = smul.addr %s3143, 2
      %s3145 = smul.addr %s3141, 32
      %s3146 = sadd.s32 %s3144, %s3145
      %s3147 = smul.addr %s3146, 8
      %s3148 = scalar_lea.vmem %s7, %s3147
      %s3149 = smul.u32 4, %s25
      %p3150 = scmp.lt.s32.totalorder %s24, 1
      %s3151 = scalar_select %p3150, %s24, 1
      %p3152 = scmp.lt.s32.totalorder %s3149, 7
      %s3153 = scalar_select %p3152, %s3149, 7
      %s3154 = smul.addr %s3151, 8
      %s3155 = sadd.s32 %s3153, %s3154
      %s3156 = smul.addr %s3155, 8
      %s3157 = scalar_lea.vmem %s8, %s3156
      // Predicated region
      $region49: #{downsample_forward.1} parent=47 // pred_check
        %p3158 = pneg %p236
      $region50: #{downsample_forward.1} parent=47 // pred_check_branch
        %3160 = sbr.rel (%p3158) target = $region52
      $region51: #{downsample_forward.1} parent=47 // pred_region
        %s3161 = smul.u32 8, %s25
      $region52: #{downsample_forward.1} parent=47 // pred_fallthru
        _
      // Predicated region
      $region53: #{downsample_forward.1} parent=47 // pred_check
        %p3162 = pneg %p264
      $region54: #{downsample_forward.1} parent=47 // pred_check_branch
        %3164 = sbr.rel (%p3162) target = $region56
      $region55: #{downsample_forward.1} parent=47 // pred_region
        %s3165 = smul.u32 4, %s25
      $region56: #{downsample_forward.1} parent=47 // pred_fallthru
        _
    $region48: #{downsample_forward.1} parent=5 // pred_fallthru
      _
    %p3166 = scmp.le.s32.totalorder 2, %s15
    // Predicated region
    $region57: #{downsample_forward.1} parent=5 // pred_check
      %p3167 = pneg %p3166
    $region58: #{downsample_forward.1} parent=5 // pred_check_branch
      %3169 = sbr.rel (%p3167) target = $region60
    $region59: #{downsample_forward.1} parent=5 // pred_region
      %s3170 = ssub.s32 %s15, 2
      // Predicated region
      $region61: #{downsample_forward.1} parent=59 // pred_check
        %p3171 = pneg %p242
      $region62: #{downsample_forward.1} parent=59 // pred_check_branch
        %3173 = sbr.rel (%p3171) target = $region64
      $region63: #{downsample_forward.1} parent=59 // pred_region
        %s3174 = smul.u32 8, %s27
        %p3175 = scmp.lt.s32.totalorder %s26, 1
        %s3176 = scalar_select %p3175, %s26, 1
        %p3177 = scmp.lt.s32.totalorder %s3174, 15
        %s3178 = scalar_select %p3177, %s3174, 15
        %s3179 = smul.addr %s3178, 2
        %s3180 = smul.addr %s3176, 32
        %s3181 = sadd.s32 %s3179, %s3180
        %s3182 = smul.addr %s3181, 8
        %s3183 = scalar_lea.vmem %s7, %s3182
      $region64: #{downsample_forward.1} parent=59 // pred_fallthru
        _
      // Predicated region
      $region65: #{downsample_forward.1} parent=59 // pred_check
        %p3184 = pneg %p270
      $region66: #{downsample_forward.1} parent=59 // pred_check_branch
        %3186 = sbr.rel (%p3184) target = $region68
      $region67: #{downsample_forward.1} parent=59 // pred_region
        %s3187 = smul.u32 4, %s27
        %p3188 = scmp.lt.s32.totalorder %s26, 1
        %s3189 = scalar_select %p3188, %s26, 1
        %p3190 = scmp.lt.s32.totalorder %s3187, 7
        %s3191 = scalar_select %p3190, %s3187, 7
        %s3192 = smul.addr %s3189, 8
        %s3193 = sadd.s32 %s3191, %s3192
        %s3194 = smul.addr %s3193, 8
        %s3195 = scalar_lea.vmem %s8, %s3194
      $region68: #{downsample_forward.1} parent=59 // pred_fallthru
        _
    $region60: #{downsample_forward.1} parent=5 // pred_fallthru
      _
  $region6: #{downsample_forward.1} parent=0 // loop_footer
    %s19 = sadd.s32 1, %s15
  $region7: #{downsample_forward.1} parent=0 // loop_footer_branch
    %14 = sbr.rel target = $region3
  $region8: #{downsample_forward.1} parent=0 // loop_exit
    _

</llo_original>
